<compile_context>
chip_gen: v6e
topology: v6e:2x2x1
jax: 0.10.0
libtpu: 0.0.40
codegen_flags: <defaults>
</compile_context>

<pallas_src>
import functools

import jax
import jax.numpy as jnp
import numpy as np
from jax.experimental import pallas as pl
from jax.experimental.pallas import tpu as pltpu


# ----------------------------- trace-time helper -----------------------------


def _tap_runs(kt, stride, padding, t_in, t_out):
    """Group output frames whose clamped source frames are consecutive.

    Returns a tuple of (t_start, src_start, length): output frames
    [t_start, t_start+length) for temporal tap `kt` read source frames
    [src_start, src_start+length) of the spatial-conv result.  Pure Python
    ints (static / trace time).
    """
    def src(t):
        return min(max(t * stride + kt - padding, 0), t_in - 1)

    runs = []
    t0 = 0
    while t0 < t_out:
        s0 = src(t0)
        length = 1
        while t0 + length < t_out and src(t0 + length) == s0 + length:
            length += 1
        runs.append((t0, s0, length))
        t0 += length
    return tuple(runs)


# ------------------------------- Pallas kernel --------------------------------


def _conv2plus1d_kernel(patches_ref, wf_ref, be_ref, o_ref, acc_ref, *,
                        runs, m):
    """Fully fused Conv2Plus1d for one batch element (one grid step).

    patches_ref: (k*k*Cin, T_in*M)   im2col of this batch element
    wf_ref:      (k, Cout, k*k*Cin)  fused weights, one matrix per temporal tap
    be_ref:      (Cout, 1)           fused bias
    o_ref:       (Cout, T_out*M)     output slab of this batch element
    acc_ref:     (Cout, T_out*M)     f32 accumulator scratch
    """
    acc_ref[...] = jnp.zeros_like(acc_ref)

    # Static double loop: k taps x (few) contiguous runs -> tiny number of
    # lane-dense accumulate matmuls (5 total for k=3, stride=1, pad=1).
    for kt, tap_runs in enumerate(runs):
        w_tap = wf_ref[kt]                                     # (Cout, kkc)
        for (t0, s0, length) in tap_runs:
            rhs = patches_ref[:, s0 * m:(s0 + length) * m]     # 128-aligned
            acc_ref[:, t0 * m:(t0 + length) * m] += jnp.dot(
                w_tap, rhs, preferred_element_type=jnp.float32)

    # Single wide lane-dense store of the whole output slab (+ fused bias).
    o_ref[...] = (acc_ref[...] + be_ref[...]).astype(o_ref.dtype)


# ---------------------------------- wrapper -----------------------------------


def conv2plus1d_pallas(x_ncdhw, w2d, b2d, w1d, b1d, *, kernel_size, stride=1,
                       padding=0):
    """x: (N, Cin, T, H, W) -> (N, Cout, T_out, H_out, W_out)."""
    n, c_in, t_in, h, w = x_ncdhw.shape
    c_out = w2d.shape[0]
    k, s, p = kernel_size, stride, padding
    h_out = (h + 2 * p - k) // s + 1
    w_out = (w + 2 * p - k) // s + 1
    t_out = (t_in + 2 * p - k) // s + 1
    m = h_out * w_out
    kkc = k * k * c_in
    # TODO(synk): lane blocking assumes h_out*w_out is a multiple of 128
    # (true for the feature-map sizes this module is used with); pad M if not.
    assert m % 128 == 0

    # ---- one-time im2col (plain XLA; rows ordered (cin, kh, kw)) ----
    # TODO(synk): if this XLA-side im2col dominates wall time at larger
    # feature maps, move it in-kernel (DMA raw x, build the k*k shifted
    # operands with pltpu.roll + edge masks).
    x_pad = jnp.pad(x_ncdhw, ((0, 0), (0, 0), (0, 0), (p, p), (p, p)))
    cols = [x_pad[:, :, :, kh:kh + s * h_out:s, kw:kw + s * w_out:s]
            for kh in range(k) for kw in range(k)]
    patches = jnp.stack(cols, axis=2)                  # (N, Cin, k*k, T, Ho, Wo)
    patches = patches.reshape(n, kkc, t_in * m)        # (N, k*k*Cin, T*M)

    # ---- fold the two linear convs into per-tap fused weights + one bias ----
    w2_mat = w2d.reshape(c_out, kkc)                           # (Cout, Cin*k*k)
    w1_taps = jnp.transpose(w1d[:, :, :, 0, 0], (2, 0, 1))     # (k, Cout, Cout)
    w_fused = jnp.einsum('koc,ci->koi', w1_taps, w2_mat)       # (k, Cout, kkc)
    b_eff = (jnp.sum(w1_taps, axis=0) @ b2d + b1d).reshape(c_out, 1)

    runs = tuple(_tap_runs(kt, s, p, t_in, t_out) for kt in range(k))

    out_flat = pl.pallas_call(
        functools.partial(_conv2plus1d_kernel, runs=runs, m=m),
        out_shape=jax.ShapeDtypeStruct((n, c_out, t_out * m), x_ncdhw.dtype),
        grid=(n,),
        in_specs=[
            pl.BlockSpec((None, kkc, t_in * m), lambda i: (i, 0, 0)),
            pl.BlockSpec((k, c_out, kkc), lambda i: (0, 0, 0)),
            pl.BlockSpec((c_out, 1), lambda i: (0, 0)),
        ],
        out_specs=pl.BlockSpec((None, c_out, t_out * m), lambda i: (i, 0, 0)),
        scratch_shapes=[pltpu.VMEM((c_out, t_out * m), jnp.float32)],
        compiler_params=pltpu.CompilerParams(
            dimension_semantics=("parallel",)),
    )(patches, w_fused, b_eff)

    # Free trailing-dim split back to NCDHW (no transpose needed).
    return out_flat.reshape(n, c_out, t_out, h_out, w_out)


# -------------------------- pure-JAX reference (check) -------------------------


def conv2plus1d_ref(x, w2d, b2d, w1d, b1d, *, kernel_size, stride=1, padding=0):
    p, s = padding, stride
    dn = jax.lax.conv_dimension_numbers(x.shape, w2d.shape,
                                        ('NCDHW', 'OIDHW', 'NCDHW'))
    y = jax.lax.conv_general_dilated(
        x, w2d, window_strides=(1, s, s),
        padding=((0, 0), (p, p), (p, p)), dimension_numbers=dn)
    y = y + b2d[None, :, None, None, None]
    y = jnp.pad(y, ((0, 0), (0, 0), (p, p), (0, 0), (0, 0)), mode='edge')
    dn2 = jax.lax.conv_dimension_numbers(y.shape, w1d.shape,
                                         ('NCDHW', 'OIDHW', 'NCDHW'))
    z = jax.lax.conv_general_dilated(
        y, w1d, window_strides=(s, 1, 1),
        padding=((0, 0), (0, 0), (0, 0)), dimension_numbers=dn2)
    return z + b1d[None, :, None, None, None]


# ------------------------------------ main -------------------------------------

if __name__ == "__main__":
    N, C_IN, C_OUT = 2, 4, 8
    T, H, W = 8, 16, 16
    K, STRIDE, PAD = 3, 1, 1

    key = jax.random.PRNGKey(0)
    kx, kw2, kb2, kw1, kb1 = jax.random.split(key, 5)

    x = jax.random.normal(kx, (N, C_IN, T, H, W), jnp.float32)
    bound2 = 1.0 / np.sqrt(C_IN * K * K)
    w2d = jax.random.uniform(kw2, (C_OUT, C_IN, 1, K, K), jnp.float32,
                             -bound2, bound2)
    b2d = jax.random.uniform(kb2, (C_OUT,), jnp.float32, -bound2, bound2)
    bound1 = 1.0 / np.sqrt(C_OUT * K)
    w1d = jax.random.uniform(kw1, (C_OUT, C_OUT, K, 1, 1), jnp.float32,
                             -bound1, bound1)
    b1d = jax.random.uniform(kb1, (C_OUT,), jnp.float32, -bound1, bound1)

    fwd = jax.jit(functools.partial(conv2plus1d_pallas, kernel_size=K,
                                    stride=STRIDE, padding=PAD))
    out = jax.block_until_ready(fwd(x, w2d, b2d, w1d, b1d))

    ref = conv2plus1d_ref(x, w2d, b2d, w1d, b1d,
                          kernel_size=K, stride=STRIDE, padding=PAD)
    np.testing.assert_allclose(np.asarray(out), np.asarray(ref),
                               rtol=1e-4, atol=1e-4)
    print("KERNEL_OK")
</pallas_src>

<mosaic_0001>
module attributes {stable_mosaic.version = 11 : i64} {
  func.func @_conv2plus1d_kernel(%arg0: i32, %arg1: memref<1x36x2048xf32, #tpu.memory_space<vmem>>, %arg2: memref<3x8x36xf32, #tpu.memory_space<vmem>>, %arg3: memref<8x1xf32, #tpu.memory_space<vmem>>, %arg4: memref<1x8x2048xf32, #tpu.memory_space<vmem>>, %arg5: memref<8x2048xf32, #tpu.memory_space<vmem>>) attributes {dimension_semantics = [#tpu.dimension_semantics<parallel>], iteration_bounds = array<i64: 2>, scalar_prefetch = 0 : i64, scratch_operands = 1 : i64, tpu.core_type = #tpu.core_type<tc>, window_params = [{transform_indices = @transform_0, window_bounds = array<i64: 1, 36, 2048>}, {pipeline_mode = #tpu.pipeline_mode<synchronous>, transform_indices = @transform_1, window_bounds = array<i64: 3, 8, 36>}, {pipeline_mode = #tpu.pipeline_mode<synchronous>, transform_indices = @transform_2, window_bounds = array<i64: 8, 1>}, {transform_indices = @transform_3, window_bounds = array<i64: 1, 8, 2048>}]} {
    %cst = arith.constant 0.000000e+00 : f32
    %0 = vector.broadcast %cst : f32 to vector<8x2048xf32>
    %c0 = arith.constant 0 : index
    %c0_0 = arith.constant 0 : index
    %1 = vector.load %arg5[%c0, %c0_0] : memref<8x2048xf32, #tpu.memory_space<vmem>>, vector<8x2048xf32>
    tpu.vector_store %arg5[%c0, %c0_0], %0 {strides = array<i32>} : memref<8x2048xf32, #tpu.memory_space<vmem>>, vector<8x2048xf32>,
    %c0_1 = arith.constant 0 : index
    %c0_2 = arith.constant 0 : index
    %c0_3 = arith.constant 0 : index
    %2 = vector.load %arg2[%c0_1, %c0_2, %c0_3] : memref<3x8x36xf32, #tpu.memory_space<vmem>>, vector<1x8x36xf32>
    %3 = vector.shape_cast %2 : vector<1x8x36xf32> to vector<8x36xf32>
    %c0_4 = arith.constant 0 : index
    %c0_5 = arith.constant 0 : index
    %c0_6 = arith.constant 0 : index
    %4 = vector.load %arg1[%c0_4, %c0_5, %c0_6] : memref<1x36x2048xf32, #tpu.memory_space<vmem>>, vector<1x36x256xf32>
    %5 = vector.shape_cast %4 : vector<1x36x256xf32> to vector<36x256xf32>
    %c0_7 = arith.constant 0 : index
    %c0_8 = arith.constant 0 : index
    %6 = vector.load %arg5[%c0_7, %c0_8] : memref<8x2048xf32, #tpu.memory_space<vmem>>, vector<8x256xf32>
    %cst_9 = arith.constant dense<0.000000e+00> : vector<8x256xf32>
    %7 = tpu.matmul %3, %5, %cst_9 {dimension_numbers = #tpu.dot_dimension_numbers<[1], [0], [0], [1], [0, 0, 1, 1], [], []>} : vector<8x36xf32>, vector<36x256xf32>, vector<8x256xf32> -> vector<8x256xf32>
    %8 = arith.addf %6, %7 : vector<8x256xf32>
    %c0_10 = arith.constant 0 : index
    %c0_11 = arith.constant 0 : index
    %9 = vector.load %arg5[%c0_10, %c0_11] : memref<8x2048xf32, #tpu.memory_space<vmem>>, vector<8x256xf32>
    tpu.vector_store %arg5[%c0_10, %c0_11], %8 {strides = array<i32>} : memref<8x2048xf32, #tpu.memory_space<vmem>>, vector<8x256xf32>,
    %c0_12 = arith.constant 0 : index
    %c0_13 = arith.constant 0 : index
    %c0_14 = arith.constant 0 : index
    %10 = vector.load %arg1[%c0_12, %c0_13, %c0_14] : memref<1x36x2048xf32, #tpu.memory_space<vmem>>, vector<1x36x1792xf32>
    %11 = vector.shape_cast %10 : vector<1x36x1792xf32> to vector<36x1792xf32>
    %c0_15 = arith.constant 0 : index
    %c256 = arith.constant 256 : index
    %12 = vector.load %arg5[%c0_15, %c256] : memref<8x2048xf32, #tpu.memory_space<vmem>>, vector<8x1792xf32>
    %cst_16 = arith.constant dense<0.000000e+00> : vector<8x1792xf32>
    %13 = tpu.matmul %3, %11, %cst_16 {dimension_numbers = #tpu.dot_dimension_numbers<[1], [0], [0], [1], [0, 0, 1, 1], [], []>} : vector<8x36xf32>, vector<36x1792xf32>, vector<8x1792xf32> -> vector<8x1792xf32>
    %14 = arith.addf %12, %13 : vector<8x1792xf32>
    %c0_17 = arith.constant 0 : index
    %c256_18 = arith.constant 256 : index
    %15 = vector.load %arg5[%c0_17, %c256_18] : memref<8x2048xf32, #tpu.memory_space<vmem>>, vector<8x1792xf32>
    tpu.vector_store %arg5[%c0_17, %c256_18], %14 {strides = array<i32>} : memref<8x2048xf32, #tpu.memory_space<vmem>>, vector<8x1792xf32>,
    %c1 = arith.constant 1 : index
    %c0_19 = arith.constant 0 : index
    %c0_20 = arith.constant 0 : index
    %16 = vector.load %arg2[%c1, %c0_19, %c0_20] : memref<3x8x36xf32, #tpu.memory_space<vmem>>, vector<1x8x36xf32>
    %17 = vector.shape_cast %16 : vector<1x8x36xf32> to vector<8x36xf32>
    %c0_21 = arith.constant 0 : index
    %c0_22 = arith.constant 0 : index
    %c0_23 = arith.constant 0 : index
    %18 = vector.load %arg1[%c0_21, %c0_22, %c0_23] : memref<1x36x2048xf32, #tpu.memory_space<vmem>>, vector<1x36x2048xf32>
    %19 = vector.shape_cast %18 : vector<1x36x2048xf32> to vector<36x2048xf32>
    %c0_24 = arith.constant 0 : index
    %c0_25 = arith.constant 0 : index
    %20 = vector.load %arg5[%c0_24, %c0_25] : memref<8x2048xf32, #tpu.memory_space<vmem>>, vector<8x2048xf32>
    %cst_26 = arith.constant dense<0.000000e+00> : vector<8x2048xf32>
    %21 = tpu.matmul %17, %19, %cst_26 {dimension_numbers = #tpu.dot_dimension_numbers<[1], [0], [0], [1], [0, 0, 1, 1], [], []>} : vector<8x36xf32>, vector<36x2048xf32>, vector<8x2048xf32> -> vector<8x2048xf32>
    %22 = arith.addf %20, %21 : vector<8x2048xf32>
    %c0_27 = arith.constant 0 : index
    %c0_28 = arith.constant 0 : index
    %23 = vector.load %arg5[%c0_27, %c0_28] : memref<8x2048xf32, #tpu.memory_space<vmem>>, vector<8x2048xf32>
    tpu.vector_store %arg5[%c0_27, %c0_28], %22 {strides = array<i32>} : memref<8x2048xf32, #tpu.memory_space<vmem>>, vector<8x2048xf32>,
    %c2 = arith.constant 2 : index
    %c0_29 = arith.constant 0 : index
    %c0_30 = arith.constant 0 : index
    %24 = vector.load %arg2[%c2, %c0_29, %c0_30] : memref<3x8x36xf32, #tpu.memory_space<vmem>>, vector<1x8x36xf32>
    %25 = vector.shape_cast %24 : vector<1x8x36xf32> to vector<8x36xf32>
    %c0_31 = arith.constant 0 : index
    %c0_32 = arith.constant 0 : index
    %c256_33 = arith.constant 256 : index
    %26 = vector.load %arg1[%c0_31, %c0_32, %c256_33] : memref<1x36x2048xf32, #tpu.memory_space<vmem>>, vector<1x36x1792xf32>
    %27 = vector.shape_cast %26 : vector<1x36x1792xf32> to vector<36x1792xf32>
    %c0_34 = arith.constant 0 : index
    %c0_35 = arith.constant 0 : index
    %28 = vector.load %arg5[%c0_34, %c0_35] : memref<8x2048xf32, #tpu.memory_space<vmem>>, vector<8x1792xf32>
    %cst_36 = arith.constant dense<0.000000e+00> : vector<8x1792xf32>
    %29 = tpu.matmul %25, %27, %cst_36 {dimension_numbers = #tpu.dot_dimension_numbers<[1], [0], [0], [1], [0, 0, 1, 1], [], []>} : vector<8x36xf32>, vector<36x1792xf32>, vector<8x1792xf32> -> vector<8x1792xf32>
    %30 = arith.addf %28, %29 : vector<8x1792xf32>
    %c0_37 = arith.constant 0 : index
    %c0_38 = arith.constant 0 : index
    %31 = vector.load %arg5[%c0_37, %c0_38] : memref<8x2048xf32, #tpu.memory_space<vmem>>, vector<8x1792xf32>
    tpu.vector_store %arg5[%c0_37, %c0_38], %30 {strides = array<i32>} : memref<8x2048xf32, #tpu.memory_space<vmem>>, vector<8x1792xf32>,
    %c0_39 = arith.constant 0 : index
    %c0_40 = arith.constant 0 : index
    %c1792 = arith.constant 1792 : index
    %32 = vector.load %arg1[%c0_39, %c0_40, %c1792] : memref<1x36x2048xf32, #tpu.memory_space<vmem>>, vector<1x36x256xf32>
    %33 = vector.shape_cast %32 : vector<1x36x256xf32> to vector<36x256xf32>
    %c0_41 = arith.constant 0 : index
    %c1792_42 = arith.constant 1792 : index
    %34 = vector.load %arg5[%c0_41, %c1792_42] : memref<8x2048xf32, #tpu.memory_space<vmem>>, vector<8x256xf32>
    %cst_43 = arith.constant dense<0.000000e+00> : vector<8x256xf32>
    %35 = tpu.matmul %25, %33, %cst_43 {dimension_numbers = #tpu.dot_dimension_numbers<[1], [0], [0], [1], [0, 0, 1, 1], [], []>} : vector<8x36xf32>, vector<36x256xf32>, vector<8x256xf32> -> vector<8x256xf32>
    %36 = arith.addf %34, %35 : vector<8x256xf32>
    %c0_44 = arith.constant 0 : index
    %c1792_45 = arith.constant 1792 : index
    %37 = vector.load %arg5[%c0_44, %c1792_45] : memref<8x2048xf32, #tpu.memory_space<vmem>>, vector<8x256xf32>
    tpu.vector_store %arg5[%c0_44, %c1792_45], %36 {strides = array<i32>} : memref<8x2048xf32, #tpu.memory_space<vmem>>, vector<8x256xf32>,
    %c0_46 = arith.constant 0 : index
    %c0_47 = arith.constant 0 : index
    %38 = vector.load %arg5[%c0_46, %c0_47] : memref<8x2048xf32, #tpu.memory_space<vmem>>, vector<8x2048xf32>
    %c0_48 = arith.constant 0 : index
    %c0_49 = arith.constant 0 : index
    %39 = vector.load %arg3[%c0_48, %c0_49] : memref<8x1xf32, #tpu.memory_space<vmem>>, vector<8x1xf32>
    %40 = vector.broadcast %39 : vector<8x1xf32> to vector<8x2048xf32>
    %41 = arith.addf %38, %40 : vector<8x2048xf32>
    %c0_50 = arith.constant 0 : index
    %c0_51 = arith.constant 0 : index
    %c0_52 = arith.constant 0 : index
    %42 = vector.load %arg4[%c0_50, %c0_51, %c0_52] : memref<1x8x2048xf32, #tpu.memory_space<vmem>>, vector<1x8x2048xf32>
    %43 = vector.shape_cast %42 : vector<1x8x2048xf32> to vector<8x2048xf32>
    %44 = vector.shape_cast %41 : vector<8x2048xf32> to vector<1x8x2048xf32>
    tpu.vector_store %arg4[%c0_50, %c0_51, %c0_52], %44 {strides = array<i32>} : memref<1x8x2048xf32, #tpu.memory_space<vmem>>, vector<1x8x2048xf32>,
    return
  }
  func.func @transform_0(%arg0: i32) -> (i32, i32, i32) {
    %c0_i32 = arith.constant 0 : i32
    %c0_i32_0 = arith.constant 0 : i32
    %c0_i32_1 = arith.constant 0 : i32
    return %arg0, %c0_i32, %c0_i32_0 : i32, i32, i32
  }
  func.func @transform_1(%arg0: i32) -> (i32, i32, i32) {
    %c0_i32 = arith.constant 0 : i32
    %c0_i32_0 = arith.constant 0 : i32
    %c0_i32_1 = arith.constant 0 : i32
    %c0_i32_2 = arith.constant 0 : i32
    return %c0_i32, %c0_i32_0, %c0_i32_1 : i32, i32, i32
  }
  func.func @transform_2(%arg0: i32) -> (i32, i32) {
    %c0_i32 = arith.constant 0 : i32
    %c0_i32_0 = arith.constant 0 : i32
    %c0_i32_1 = arith.constant 0 : i32
    return %c0_i32, %c0_i32_0 : i32, i32
  }
  func.func @transform_3(%arg0: i32) -> (i32, i32, i32) {
    %c0_i32 = arith.constant 0 : i32
    %c0_i32_0 = arith.constant 0 : i32
    %c0_i32_1 = arith.constant 0 : i32
    return %arg0, %c0_i32, %c0_i32_0 : i32, i32, i32
  }
}

</mosaic_0001>

<llo_original>
// kernel: conv2plus1d_pallas.1
$region0: #{conv2plus1d_pallas.1}
  #allocation0 [shape = 'u32[]', space=smem, size = 0x4, offset = 0x4, fixed_abs, tag = 'smem constant byte address 0x4 - core index']
  #allocation1 [shape = 'u32[144,128]{1,0:T(1,128)}', space=vmem, size = 0x12000, scoped, tag = 'internal scratch']
  #allocation2 [shape = 'f32[8,2048]{1,0:T(8,128)}', space=vmem, size = 0x10000, scoped, tag = 'scratch operand']
  %s0 = inlined_call_operand.vmem [shape: f32[2,36,2048], index: 0, kind: input, shape index: {}]
  %s1 = inlined_call_operand.vmem [shape: f32[3,8,36], index: 1, kind: input, shape index: {}]
  %s2 = inlined_call_operand.vmem [shape: f32[8,1], index: 2, kind: input, shape index: {}]
  %s3 = inlined_call_operand.vmem [shape: f32[2,8,2048], index: 3, kind: output, shape index: {}]
  %s4 = sld [smem:[#allocation0]]
  $region45: #{conv2plus1d_pallas.1} parent=0
    _
  %s6 = ssub.s32 1, %s4
  %s7 = scalar_select 0, %s6, %s4
  loop: start=0, step=1, limit=4
  $region2: #{conv2plus1d_pallas.1} parent=0 // loop_pre_header
    _
  $region3: #{conv2plus1d_pallas.1} parent=0 // loop_header
    %s9 = sphi 0, %s13
    %p10 = scmp.ge.s32.totalorder %s9, 4
    %s19 = sphi 0, %s21
    %s22 = sphi 0, %s19
    %s23 = sphi 0, %s22
    %s39 = sphi 0, %s23
    %s43 = sphi 0, %s43
    %s45 = sphi 0, %s43
    %s46 = sphi 0, %s45
    %s60 = sphi 0, %s46
    %s64 = sphi 0, %s64
    %s66 = sphi 0, %s64
    %s67 = sphi 0, %s66
    %s81 = sphi 0, %s67
    %s87 = sphi 0, %s89
    %s90 = sphi 0, %s87
    %s91 = sphi 0, %s90
    %s107 = sphi 0, %s91
  $region4: #{conv2plus1d_pallas.1} parent=0 // loop_header_branch
    %12 = sbr.rel (%p10) target = $region8
  $region5: #{conv2plus1d_pallas.1} parent=0 // loop_body
    %s14 = ssub.s32 %s9, 1
    %s15 = ssub.s32 %s9, 2
    %s16 = sadd.s32 %s9, 1
    %s17 = ssub.s32 %s9, %s16
    %p18 = scmp.eq.s32.totalorder %s17, 0
    %s20 = sadd.s32 %s19, 1
    %s21 = scalar_select %p18, %s19, %s20
    %p24 = pneg %p18
    %p25 = scmp.eq.s32.totalorder %s9, 1
    %p26 = por %p24, %p25
    %p27 = scmp.ne.s32.totalorder %s19, %s22
    %p28 = scmp.eq.s32.totalorder %s9, 0
    %p29 = por %p27, %p28
    %p30 = scmp.ne.s32.totalorder %s19, %s22
    %p31 = scmp.eq.s32.totalorder %s14, 1
    %p32 = por %p30, %p31
    %p33 = scmp.ne.s32.totalorder %s22, %s23
    %p34 = scmp.eq.s32.totalorder %s14, 0
    %p35 = por %p33, %p34
    %p36 = scmp.ne.s32.totalorder %s22, %s23
    %p37 = scmp.eq.s32.totalorder %s15, 1
    %p38 = por %p36, %p37
    %p40 = scmp.ne.s32.totalorder %s23, %s39
    %p41 = scmp.eq.s32.totalorder %s15, 0
    %p42 = por %p40, %p41
    %s44 = sadd.s32 %s43, 1
    %p47 = scmp.eq.s32.totalorder %s9, 1
    %p48 = scmp.ne.s32.totalorder %s43, %s45
    %p49 = scmp.eq.s32.totalorder %s9, 0
    %p50 = por %p48, %p49
    %p51 = scmp.ne.s32.totalorder %s43, %s45
    %p52 = scmp.eq.s32.totalorder %s14, 1
    %p53 = por %p51, %p52
    %p54 = scmp.ne.s32.totalorder %s45, %s46
    %p55 = scmp.eq.s32.totalorder %s14, 0
    %p56 = por %p54, %p55
    %p57 = scmp.ne.s32.totalorder %s45, %s46
    %p58 = scmp.eq.s32.totalorder %s15, 1
    %p59 = por %p57, %p58
    %p61 = scmp.ne.s32.totalorder %s46, %s60
    %p62 = scmp.eq.s32.totalorder %s15, 0
    %p63 = por %p61, %p62
    %s65 = sadd.s32 %s64, 1
    %p68 = scmp.eq.s32.totalorder %s9, 1
    %p69 = scmp.ne.s32.totalorder %s64, %s66
    %p70 = scmp.eq.s32.totalorder %s9, 0
    %p71 = por %p69, %p70
    %p72 = scmp.ne.s32.totalorder %s64, %s66
    %p73 = scmp.eq.s32.totalorder %s14, 1
    %p74 = por %p72, %p73
    %p75 = scmp.ne.s32.totalorder %s66, %s67
    %p76 = scmp.eq.s32.totalorder %s14, 0
    %p77 = por %p75, %p76
    %p78 = scmp.ne.s32.totalorder %s66, %s67
    %p79 = scmp.eq.s32.totalorder %s15, 1
    %p80 = por %p78, %p79
    %p82 = scmp.ne.s32.totalorder %s67, %s81
    %p83 = scmp.eq.s32.totalorder %s15, 0
    %p84 = por %p82, %p83
    %s85 = ssub.s32 %s9, %s16
    %p86 = scmp.eq.s32.totalorder %s85, 0
    %s88 = sadd.s32 %s87, 1
    %s89 = scalar_select %p86, %s87, %s88
    %p92 = pneg %p86
    %p93 = scmp.eq.s32.totalorder %s9, 1
    %p94 = por %p92, %p93
    %p95 = scmp.ne.s32.totalorder %s87, %s90
    %p96 = scmp.eq.s32.totalorder %s9, 0
    %p97 = por %p95, %p96
    %p98 = scmp.ne.s32.totalorder %s87, %s90
    %p99 = scmp.eq.s32.totalorder %s14, 1
    %p100 = por %p98, %p99
    %p101 = scmp.ne.s32.totalorder %s90, %s91
    %p102 = scmp.eq.s32.totalorder %s14, 0
    %p103 = por %p101, %p102
    %p104 = scmp.ne.s32.totalorder %s90, %s91
    %p105 = scmp.eq.s32.totalorder %s15, 1
    %p106 = por %p104, %p105
    %p108 = scmp.ne.s32.totalorder %s91, %s107
    %p109 = scmp.eq.s32.totalorder %s15, 0
    %p110 = por %p108, %p109
    %p111 = scmp.le.s32.totalorder 1, %s9
    %p112 = scmp.lt.s32.totalorder %s9, 3
    %p113 = pnand %p111, %p112
    %p114 = pneg %p113
    // Predicated region
    $region9: #{conv2plus1d_pallas.1} parent=5 // pred_check
      _
    $region10: #{conv2plus1d_pallas.1} parent=5 // pred_check_branch
      %116 = sbr.rel (%p113) target = $region12
    $region11: #{conv2plus1d_pallas.1} parent=5 // pred_region
      %s117 = ssub.s32 %s9, 1
      // Predicated region
      $region13: #{conv2plus1d_pallas.1} parent=11 // pred_check
        %p118 = pneg %p56
      $region14: #{conv2plus1d_pallas.1} parent=11 // pred_check_branch
        %120 = sbr.rel (%p118) target = $region16
      $region15: #{conv2plus1d_pallas.1} parent=11 // pred_region
        _
      $region16: #{conv2plus1d_pallas.1} parent=11 // pred_fallthru
        _
      // Predicated region
      $region17: #{conv2plus1d_pallas.1} parent=11 // pred_check
        %p121 = pneg %p77
      $region18: #{conv2plus1d_pallas.1} parent=11 // pred_check_branch
        %123 = sbr.rel (%p121) target = $region20
      $region19: #{conv2plus1d_pallas.1} parent=11 // pred_region
        _
      $region20: #{conv2plus1d_pallas.1} parent=11 // pred_fallthru
        _
    $region12: #{conv2plus1d_pallas.1} parent=5 // pred_fallthru
      _
    %p124 = scmp.lt.s32.totalorder %s9, 2
    // Predicated region
    $region21: #{conv2plus1d_pallas.1} parent=5 // pred_check
      %p125 = pneg %p124
    $region22: #{conv2plus1d_pallas.1} parent=5 // pred_check_branch
      %127 = sbr.rel (%p125) target = $region24
    $region23: #{conv2plus1d_pallas.1} parent=5 // pred_region
      // Predicated region
      $region25: #{conv2plus1d_pallas.1} parent=23 // pred_check
        %p128 = pneg %p29
      $region26: #{conv2plus1d_pallas.1} parent=23 // pred_check_branch
        %130 = sbr.rel (%p128) target = $region28
      $region27: #{conv2plus1d_pallas.1} parent=23 // pred_region
        %p131 = scmp.lt.s32.totalorder %s9, 1
        %s132 = scalar_select %p131, %s9, 1
        %s133 = smul.addr %s132, 80
        %s134 = smul.addr %s133, 8
        %s135 = scalar_lea.vmem %s0, %s134
      $region28: #{conv2plus1d_pallas.1} parent=23 // pred_fallthru
        _
    $region24: #{conv2plus1d_pallas.1} parent=5 // pred_fallthru
      _
    %p136 = scmp.le.s32.totalorder 1, %s9
    %p137 = scmp.lt.s32.totalorder %s9, 3
    %p138 = pnand %p136, %p137
    %p139 = pneg %p138
    // Predicated region
    $region29: #{conv2plus1d_pallas.1} parent=5 // pred_check
      _
    $region30: #{conv2plus1d_pallas.1} parent=5 // pred_check_branch
      %141 = sbr.rel (%p138) target = $region32
    $region31: #{conv2plus1d_pallas.1} parent=5 // pred_region
      %s142 = ssub.s32 %s9, 1
      %p143 = scmp.lt.s32.totalorder %s14, 1
      %s144 = scalar_select %p143, %s14, 1
      %s145 = smul.addr %s144, 80
      %s146 = smul.addr %s145, 8
      %s147 = scalar_lea.vmem %s0, %s146
      %p148 = pneg %p35
      %p149 = pneg %p32
      %p150 = pneg %p56
      %p151 = pneg %p53
      %p152 = pneg %p77
      %p153 = pneg %p74
      %p154 = pneg %p103
      %p155 = pneg %p100
      %p156 = scmp.lt.s32.totalorder %s14, 1
      %s157 = scalar_select %p156, %s14, 1
      %s158 = smul.addr %s157, 16
      %s159 = smul.addr %s158, 8
      %s160 = scalar_lea.vmem %s3, %s159
      %p161 = scmp.lt.s32.totalorder %s14, 1
      %s162 = scalar_select %p161, %s14, 1
      %s163 = smul.addr %s162, 80
      %s164 = smul.addr %s163, 8
      %s165 = scalar_lea.vmem %s0, %s164
      %p166 = scmp.lt.s32.totalorder %s14, 1
      %s167 = scalar_select %p166, %s14, 1
      %s168 = smul.addr %s167, 16
      %s169 = smul.addr %s168, 8
      %s170 = scalar_lea.vmem %s3, %s169
      %171 = vst [vmem:[#allocation2] sm:$0xff] 0.0
      %172 = vst [vmem:[#allocation2 + $0x8] sm:$0xff] 0.0
      %173 = vst [vmem:[#allocation2 + $0x10] sm:$0xff] 0.0
      %174 = vst [vmem:[#allocation2 + $0x18] sm:$0xff] 0.0
      %175 = vst [vmem:[#allocation2 + $0x20] sm:$0xff] 0.0
      %176 = vst [vmem:[#allocation2 + $0x28] sm:$0xff] 0.0
      %177 = vst [vmem:[#allocation2 + $0x30] sm:$0xff] 0.0
      %178 = vst [vmem:[#allocation2 + $0x38] sm:$0xff] 0.0
      %179 = vst [vmem:[#allocation2 + $0x40] sm:$0xff] 0.0
      %180 = vst [vmem:[#allocation2 + $0x48] sm:$0xff] 0.0
      %181 = vst [vmem:[#allocation2 + $0x50] sm:$0xff] 0.0
      %182 = vst [vmem:[#allocation2 + $0x58] sm:$0xff] 0.0
      %183 = vst [vmem:[#allocation2 + $0x60] sm:$0xff] 0.0
      %184 = vst [vmem:[#allocation2 + $0x68] sm:$0xff] 0.0
      %185 = vst [vmem:[#allocation2 + $0x70] sm:$0xff] 0.0
      %186 = vst [vmem:[#allocation2 + $0x78] sm:$0xff] 0.0
      %v187 = vld [vmem:[%s1] sm:$0xff]
      %v188 = vld [vmem:[%s165] sm:$0xff]
      %v189 = vld [vmem:[%s165 + $0x8] sm:$0xff]
      %v190 = vld [vmem:[%s165 + $0x80] sm:$0xff]
      %v191 = vld [vmem:[%s165 + $0x88] sm:$0xff]
      %v192 = vld [vmem:[%s165 + $0x100] sm:$0xff]
      %v193 = vld [vmem:[%s165 + $0x108] sm:$0xff]
      %v194 = vld [vmem:[%s165 + $0x180] sm:$0xff]
      %v195 = vld [vmem:[%s165 + $0x188] sm:$0xff]
      %v196 = vld [vmem:[%s165 + $0x200] sm:$0xf]
      %v197 = vld [vmem:[%s165 + $0x208] sm:$0xf]
      %v198 = vld [vmem:[#allocation2] sm:$0xff]
      %v199 = vld [vmem:[#allocation2 + $0x8] sm:$0xff]
      %vm200 = vcmask 293888
      %v202 = vsel %vm200, %v187, 0
      %vm204 = vcmask 1043456
      %v206 = vsel %vm204, %v196, 0
      %v209 = vsel %vm204, %v197, 0
      %211 = vmatprep.subr.mxu0 0.0
      %212 = vmatpush1.msra.mxu0 0.0
      %213 = vmatprep.subr.mxu0 0.0
      %214 = vmatpush1.msra.mxu0 0.0
      %215 = vmatprep.subr.mxu0 0.0
      %216 = vmatpush1.msra.mxu0 0.0
      %217 = vmatprep.subr.mxu0 0.0
      %218 = vmatpush1.msra.mxu0 0.0
      %219 = vmatprep.subr.mxu0 0.0
      %220 = vmatpush1.msra.mxu0 0.0
      %221 = vmatprep.subr.mxu0 0.0
      %222 = vmatpush1.msra.mxu0 0.0
      %223 = vmatprep.subr.mxu0 0.0
      %224 = vmatpush1.msra.mxu0 0.0
      %225 = vmatprep.subr.mxu0 0.0
      %226 = vmatpush1.msra.mxu0 0.0
      %227 = vmatprep.subr.mxu0 0.0
      %228 = vmatpush1.msra.mxu0 0.0
      %229 = vmatprep.subr.mxu0 0.0
      %230 = vmatpush1.msra.mxu0 0.0
      %231 = vmatprep.subr.mxu0 0.0
      %232 = vmatpush1.msra.mxu0 0.0
      %233 = vmatprep.subr.mxu0 %v209
      %234 = vmatpush1.msra.mxu0 %v206
      %235 = vmatprep.subr.mxu0 %v195
      %236 = vmatpush1.msra.mxu0 %v194
      %237 = vmatprep.subr.mxu0 %v193
      %238 = vmatpush1.msra.mxu0 %v192
      %239 = vmatprep.subr.mxu0 %v191
      %240 = vmatpush1.msra.mxu0 %v190
      %241 = vmatprep.subr.mxu0 %v189
      %242 = vmatpush1.msra.mxu0 %v188
      %243 = vmatprep.subr.mxu0 0.0
      %244 = vmatpush2.msra.mxu0 0.0
      %245 = vmatprep.subr.mxu0 0.0
      %246 = vmatpush2.msra.mxu0 0.0
      %247 = vmatprep.subr.mxu0 0.0
      %248 = vmatpush2.msra.mxu0 0.0
      %249 = vmatprep.subr.mxu0 0.0
      %250 = vmatpush2.msra.mxu0 0.0
      %251 = vmatprep.subr.mxu0 0.0
      %252 = vmatpush2.msra.mxu0 0.0
      %253 = vmatprep.subr.mxu0 0.0
      %254 = vmatpush2.msra.mxu0 0.0
      %255 = vmatprep.subr.mxu0 0.0
      %256 = vmatpush2.msra.mxu0 0.0
      %257 = vmatprep.subr.mxu0 0.0
      %258 = vmatpush2.msra.mxu0 0.0
      %259 = vmatprep.subr.mxu0 0.0
      %260 = vmatpush2.msra.mxu0 0.0
      %261 = vmatprep.subr.mxu0 0.0
      %262 = vmatpush2.msra.mxu0 0.0
      %263 = vmatprep.subr.mxu0 0.0
      %264 = vmatpush2.msra.mxu0 0.0
      %265 = vmatprep.subr.mxu0 0.0
      %266 = vmatpush2.msra.mxu0 0.0
      %267 = vmatprep.subr.mxu0 0.0
      %268 = vmatpush2.msra.mxu0 0.0
      %269 = vmatprep.subr.mxu0 0.0
      %270 = vmatpush2.msra.mxu0 0.0
      %271 = vmatprep.subr.mxu0 0.0
      %272 = vmatpush2.msra.mxu0 0.0
      %273 = vmatprep.subr.mxu0 0.0
      %274 = vmatpush2.msra.mxu0 0.0
      %275 = vmatprep.mubr.f32.mxu0 0.0
      %276 = vmatmul.mubr.f32.gmra.mxu0 %v202
      %v277 = vpop.f32.mrf.mxu0
      %v278 = vadd.f32 0.0, %v277
      %v279 = vpop.f32.mrf.mxu0
      %v280 = vadd.f32 0.0, %v279
      %281 = vdwg.mxu0
      %v282 = vadd.f32 %v198, %v278
      %v283 = vadd.f32 %v199, %v280
      %284 = vst [vmem:[#allocation2] sm:$0xff] %v282
      %285 = vst [vmem:[#allocation2 + $0x8] sm:$0xff] %v283
      %v286 = vld [vmem:[%s165] sm:$0xff]
      %v287 = vld [vmem:[%s165 + $0x8] sm:$0xff]
      %v288 = vld [vmem:[%s165 + $0x10] sm:$0xff]
      %v289 = vld [vmem:[%s165 + $0x18] sm:$0xff]
      %v290 = vld [vmem:[%s165 + $0x20] sm:$0xff]
      %v291 = vld [vmem:[%s165 + $0x28] sm:$0xff]
      %v292 = vld [vmem:[%s165 + $0x30] sm:$0xff]
      %v293 = vld [vmem:[%s165 + $0x38] sm:$0xff]
      %v294 = vld [vmem:[%s165 + $0x40] sm:$0xff]
      %v295 = vld [vmem:[%s165 + $0x48] sm:$0xff]
      %v296 = vld [vmem:[%s165 + $0x50] sm:$0xff]
      %v297 = vld [vmem:[%s165 + $0x58] sm:$0xff]
      %v298 = vld [vmem:[%s165 + $0x60] sm:$0xff]
      %v299 = vld [vmem:[%s165 + $0x68] sm:$0xff]
      %v300 = vld [vmem:[%s165 + $0x80] sm:$0xff]
      %v301 = vld [vmem:[%s165 + $0x88] sm:$0xff]
      %v302 = vld [vmem:[%s165 + $0x90] sm:$0xff]
      %v303 = vld [vmem:[%s165 + $0x98] sm:$0xff]
      %v304 = vld [vmem:[%s165 + $0xa0] sm:$0xff]
      %v305 = vld [vmem:[%s165 + $0xa8] sm:$0xff]
      %v306 = vld [vmem:[%s165 + $0xb0] sm:$0xff]
      %v307 = vld [vmem:[%s165 + $0xb8] sm:$0xff]
      %v308 = vld [vmem:[%s165 + $0xc0] sm:$0xff]
      %v309 = vld [vmem:[%s165 + $0xc8] sm:$0xff]
      %v310 = vld [vmem:[%s165 + $0xd0] sm:$0xff]
      %v311 = vld [vmem:[%s165 + $0xd8] sm:$0xff]
      %v312 = vld [vmem:[%s165 + $0xe0] sm:$0xff]
      %v313 = vld [vmem:[%s165 + $0xe8] sm:$0xff]
      %v314 = vld [vmem:[%s165 + $0x100] sm:$0xff]
      %v315 = vld [vmem:[%s165 + $0x108] sm:$0xff]
      %v316 = vld [vmem:[%s165 + $0x110] sm:$0xff]
      %v317 = vld [vmem:[%s165 + $0x118] sm:$0xff]
      %v318 = vld [vmem:[%s165 + $0x120] sm:$0xff]
      %v319 = vld [vmem:[%s165 + $0x128] sm:$0xff]
      %v320 = vld [vmem:[%s165 + $0x130] sm:$0xff]
      %v321 = vld [vmem:[%s165 + $0x138] sm:$0xff]
      %v322 = vld [vmem:[%s165 + $0x140] sm:$0xff]
      %v323 = vld [vmem:[%s165 + $0x148] sm:$0xff]
      %v324 = vld [vmem:[%s165 + $0x150] sm:$0xff]
      %v325 = vld [vmem:[%s165 + $0x158] sm:$0xff]
      %v326 = vld [vmem:[%s165 + $0x160] sm:$0xff]
      %v327 = vld [vmem:[%s165 + $0x168] sm:$0xff]
      %v328 = vld [vmem:[%s165 + $0x180] sm:$0xff]
      %v329 = vld [vmem:[%s165 + $0x188] sm:$0xff]
      %v330 = vld [vmem:[%s165 + $0x190] sm:$0xff]
      %v331 = vld [vmem:[%s165 + $0x198] sm:$0xff]
      %v332 = vld [vmem:[%s165 + $0x1a0] sm:$0xff]
      %v333 = vld [vmem:[%s165 + $0x1a8] sm:$0xff]
      %v334 = vld [vmem:[%s165 + $0x1b0] sm:$0xff]
      %v335 = vld [vmem:[%s165 + $0x1b8] sm:$0xff]
      %v336 = vld [vmem:[%s165 + $0x1c0] sm:$0xff]
      %v337 = vld [vmem:[%s165 + $0x1c8] sm:$0xff]
      %v338 = vld [vmem:[%s165 + $0x1d0] sm:$0xff]
      %v339 = vld [vmem:[%s165 + $0x1d8] sm:$0xff]
      %v340 = vld [vmem:[%s165 + $0x1e0] sm:$0xff]
      %v341 = vld [vmem:[%s165 + $0x1e8] sm:$0xff]
      %v342 = vld [vmem:[%s165 + $0x200] sm:$0xf]
      %v343 = vld [vmem:[%s165 + $0x208] sm:$0xf]
      %v344 = vld [vmem:[%s165 + $0x210] sm:$0xf]
      %v345 = vld [vmem:[%s165 + $0x218] sm:$0xf]
      %v346 = vld [vmem:[%s165 + $0x220] sm:$0xf]
      %v347 = vld [vmem:[%s165 + $0x228] sm:$0xf]
      %v348 = vld [vmem:[%s165 + $0x230] sm:$0xf]
      %v349 = vld [vmem:[%s165 + $0x238] sm:$0xf]
      %v350 = vld [vmem:[%s165 + $0x240] sm:$0xf]
      %v351 = vld [vmem:[%s165 + $0x248] sm:$0xf]
      %v352 = vld [vmem:[%s165 + $0x250] sm:$0xf]
      %v353 = vld [vmem:[%s165 + $0x258] sm:$0xf]
      %v354 = vld [vmem:[%s165 + $0x260] sm:$0xf]
      %v355 = vld [vmem:[%s165 + $0x268] sm:$0xf]
      %v356 = vld [vmem:[#allocation2 + $0x10] sm:$0xff]
      %v357 = vld [vmem:[#allocation2 + $0x18] sm:$0xff]
      %v358 = vld [vmem:[#allocation2 + $0x20] sm:$0xff]
      %v359 = vld [vmem:[#allocation2 + $0x28] sm:$0xff]
      %v360 = vld [vmem:[#allocation2 + $0x30] sm:$0xff]
      %v361 = vld [vmem:[#allocation2 + $0x38] sm:$0xff]
      %v362 = vld [vmem:[#allocation2 + $0x40] sm:$0xff]
      %v363 = vld [vmem:[#allocation2 + $0x48] sm:$0xff]
      %v364 = vld [vmem:[#allocation2 + $0x50] sm:$0xff]
      %v365 = vld [vmem:[#allocation2 + $0x58] sm:$0xff]
      %v366 = vld [vmem:[#allocation2 + $0x60] sm:$0xff]
      %v367 = vld [vmem:[#allocation2 + $0x68] sm:$0xff]
      %v368 = vld [vmem:[#allocation2 + $0x70] sm:$0xff]
      %v369 = vld [vmem:[#allocation2 + $0x78] sm:$0xff]
      %v371 = vsel %vm204, %v342, 0
      %v374 = vsel %vm204, %v343, 0
      %v377 = vsel %vm204, %v344, 0
      %v380 = vsel %vm204, %v345, 0
      %v383 = vsel %vm204, %v346, 0
      %v386 = vsel %vm204, %v347, 0
      %v389 = vsel %vm204, %v348, 0
      %v392 = vsel %vm204, %v349, 0
      %v395 = vsel %vm204, %v350, 0
      %v398 = vsel %vm204, %v351, 0
      %v401 = vsel %vm204, %v352, 0
      %v404 = vsel %vm204, %v353, 0
      %v407 = vsel %vm204, %v354, 0
      %v410 = vsel %vm204, %v355, 0
      %412 = vmatprep.subr.mxu0 0.0
      %413 = vmatpush1.msra.mxu0 0.0
      %414 = vmatprep.subr.mxu0 0.0
      %415 = vmatpush1.msra.mxu0 0.0
      %416 = vmatprep.subr.mxu0 0.0
      %417 = vmatpush1.msra.mxu0 0.0
      %418 = vmatprep.subr.mxu0 0.0
      %419 = vmatpush1.msra.mxu0 0.0
      %420 = vmatprep.subr.mxu0 0.0
      %421 = vmatpush1.msra.mxu0 0.0
      %422 = vmatprep.subr.mxu0 0.0
      %423 = vmatpush1.msra.mxu0 0.0
      %424 = vmatprep.subr.mxu0 0.0
      %425 = vmatpush1.msra.mxu0 0.0
      %426 = vmatprep.subr.mxu0 0.0
      %427 = vmatpush1.msra.mxu0 0.0
      %428 = vmatprep.subr.mxu0 0.0
      %429 = vmatpush1.msra.mxu0 0.0
      %430 = vmatprep.subr.mxu0 0.0
      %431 = vmatpush1.msra.mxu0 0.0
      %432 = vmatprep.subr.mxu0 0.0
      %433 = vmatpush1.msra.mxu0 0.0
      %434 = vmatprep.subr.mxu0 %v374
      %435 = vmatpush1.msra.mxu0 %v371
      %436 = vmatprep.subr.mxu0 %v329
      %437 = vmatpush1.msra.mxu0 %v328
      %438 = vmatprep.subr.mxu0 %v315
      %439 = vmatpush1.msra.mxu0 %v314
      %440 = vmatprep.subr.mxu0 %v301
      %441 = vmatpush1.msra.mxu0 %v300
      %442 = vmatprep.subr.mxu0 %v287
      %443 = vmatpush1.msra.mxu0 %v286
      %444 = vmatprep.subr.mxu0 0.0
      %445 = vmatpush2.msra.mxu0 0.0
      %446 = vmatprep.subr.mxu0 0.0
      %447 = vmatpush2.msra.mxu0 0.0
      %448 = vmatprep.subr.mxu0 0.0
      %449 = vmatpush2.msra.mxu0 0.0
      %450 = vmatprep.subr.mxu0 0.0
      %451 = vmatpush2.msra.mxu0 0.0
      %452 = vmatprep.subr.mxu0 0.0
      %453 = vmatpush2.msra.mxu0 0.0
      %454 = vmatprep.subr.mxu0 0.0
      %455 = vmatpush2.msra.mxu0 0.0
      %456 = vmatprep.subr.mxu0 0.0
      %457 = vmatpush2.msra.mxu0 0.0
      %458 = vmatprep.subr.mxu0 0.0
      %459 = vmatpush2.msra.mxu0 0.0
      %460 = vmatprep.subr.mxu0 0.0
      %461 = vmatpush2.msra.mxu0 0.0
      %462 = vmatprep.subr.mxu0 0.0
      %463 = vmatpush2.msra.mxu0 0.0
      %464 = vmatprep.subr.mxu0 0.0
      %465 = vmatpush2.msra.mxu0 0.0
      %466 = vmatprep.subr.mxu0 0.0
      %467 = vmatpush2.msra.mxu0 0.0
      %468 = vmatprep.subr.mxu0 0.0
      %469 = vmatpush2.msra.mxu0 0.0
      %470 = vmatprep.subr.mxu0 0.0
      %471 = vmatpush2.msra.mxu0 0.0
      %472 = vmatprep.subr.mxu0 0.0
      %473 = vmatpush2.msra.mxu0 0.0
      %474 = vmatprep.subr.mxu0 0.0
      %475 = vmatpush2.msra.mxu0 0.0
      %476 = vmatprep.mubr.f32.mxu0 0.0
      %477 = vmatmul.mubr.f32.gmra.mxu0 %v202
      %v478 = vpop.f32.mrf.mxu0
      %v479 = vadd.f32 0.0, %v478
      %v480 = vpop.f32.mrf.mxu0
      %v481 = vadd.f32 0.0, %v480
      %482 = vdwg.mxu0
      %483 = vmatprep.subr.mxu0 0.0
      %484 = vmatpush1.msra.mxu0 0.0
      %485 = vmatprep.subr.mxu0 0.0
      %486 = vmatpush1.msra.mxu0 0.0
      %487 = vmatprep.subr.mxu0 0.0
      %488 = vmatpush1.msra.mxu0 0.0
      %489 = vmatprep.subr.mxu0 0.0
      %490 = vmatpush1.msra.mxu0 0.0
      %491 = vmatprep.subr.mxu0 0.0
      %492 = vmatpush1.msra.mxu0 0.0
      %493 = vmatprep.subr.mxu0 0.0
      %494 = vmatpush1.msra.mxu0 0.0
      %495 = vmatprep.subr.mxu0 0.0
      %496 = vmatpush1.msra.mxu0 0.0
      %497 = vmatprep.subr.mxu0 0.0
      %498 = vmatpush1.msra.mxu0 0.0
      %499 = vmatprep.subr.mxu0 0.0
      %500 = vmatpush1.msra.mxu0 0.0
      %501 = vmatprep.subr.mxu0 0.0
      %502 = vmatpush1.msra.mxu0 0.0
      %503 = vmatprep.subr.mxu0 0.0
      %504 = vmatpush1.msra.mxu0 0.0
      %505 = vmatprep.subr.mxu0 %v380
      %506 = vmatpush1.msra.mxu0 %v377
      %507 = vmatprep.subr.mxu0 %v331
      %508 = vmatpush1.msra.mxu0 %v330
      %509 = vmatprep.subr.mxu0 %v317
      %510 = vmatpush1.msra.mxu0 %v316
      %511 = vmatprep.subr.mxu0 %v303
      %512 = vmatpush1.msra.mxu0 %v302
      %513 = vmatprep.subr.mxu0 %v289
      %514 = vmatpush1.msra.mxu0 %v288
      %515 = vmatprep.subr.mxu0 0.0
      %516 = vmatpush2.msra.mxu0 0.0
      %517 = vmatprep.subr.mxu0 0.0
      %518 = vmatpush2.msra.mxu0 0.0
      %519 = vmatprep.subr.mxu0 0.0
      %520 = vmatpush2.msra.mxu0 0.0
      %521 = vmatprep.subr.mxu0 0.0
      %522 = vmatpush2.msra.mxu0 0.0
      %523 = vmatprep.subr.mxu0 0.0
      %524 = vmatpush2.msra.mxu0 0.0
      %525 = vmatprep.subr.mxu0 0.0
      %526 = vmatpush2.msra.mxu0 0.0
      %527 = vmatprep.subr.mxu0 0.0
      %528 = vmatpush2.msra.mxu0 0.0
      %529 = vmatprep.subr.mxu0 0.0
      %530 = vmatpush2.msra.mxu0 0.0
      %531 = vmatprep.subr.mxu0 0.0
      %532 = vmatpush2.msra.mxu0 0.0
      %533 = vmatprep.subr.mxu0 0.0
      %534 = vmatpush2.msra.mxu0 0.0
      %535 = vmatprep.subr.mxu0 0.0
      %536 = vmatpush2.msra.mxu0 0.0
      %537 = vmatprep.subr.mxu0 0.0
      %538 = vmatpush2.msra.mxu0 0.0
      %539 = vmatprep.subr.mxu0 0.0
      %540 = vmatpush2.msra.mxu0 0.0
      %541 = vmatprep.subr.mxu0 0.0
      %542 = vmatpush2.msra.mxu0 0.0
      %543 = vmatprep.subr.mxu0 0.0
      %544 = vmatpush2.msra.mxu0 0.0
      %545 = vmatprep.subr.mxu0 0.0
      %546 = vmatpush2.msra.mxu0 0.0
      %547 = vmatprep.mubr.f32.mxu0 0.0
      %548 = vmatmul.mubr.f32.gmra.mxu0 %v202
      %v549 = vpop.f32.mrf.mxu0
      %v550 = vadd.f32 0.0, %v549
      %v551 = vpop.f32.mrf.mxu0
      %v552 = vadd.f32 0.0, %v551
      %553 = vdwg.mxu0
      %554 = vmatprep.subr.mxu0 0.0
      %555 = vmatpush1.msra.mxu0 0.0
      %556 = vmatprep.subr.mxu0 0.0
      %557 = vmatpush1.msra.mxu0 0.0
      %558 = vmatprep.subr.mxu0 0.0
      %559 = vmatpush1.msra.mxu0 0.0
      %560 = vmatprep.subr.mxu0 0.0
      %561 = vmatpush1.msra.mxu0 0.0
      %562 = vmatprep.subr.mxu0 0.0
      %563 = vmatpush1.msra.mxu0 0.0
      %564 = vmatprep.subr.mxu0 0.0
      %565 = vmatpush1.msra.mxu0 0.0
      %566 = vmatprep.subr.mxu0 0.0
      %567 = vmatpush1.msra.mxu0 0.0
      %568 = vmatprep.subr.mxu0 0.0
      %569 = vmatpush1.msra.mxu0 0.0
      %570 = vmatprep.subr.mxu0 0.0
      %571 = vmatpush1.msra.mxu0 0.0
      %572 = vmatprep.subr.mxu0 0.0
      %573 = vmatpush1.msra.mxu0 0.0
      %574 = vmatprep.subr.mxu0 0.0
      %575 = vmatpush1.msra.mxu0 0.0
      %576 = vmatprep.subr.mxu0 %v386
      %577 = vmatpush1.msra.mxu0 %v383
      %578 = vmatprep.subr.mxu0 %v333
      %579 = vmatpush1.msra.mxu0 %v332
      %580 = vmatprep.subr.mxu0 %v319
      %581 = vmatpush1.msra.mxu0 %v318
      %582 = vmatprep.subr.mxu0 %v305
      %583 = vmatpush1.msra.mxu0 %v304
      %584 = vmatprep.subr.mxu0 %v291
      %585 = vmatpush1.msra.mxu0 %v290
      %586 = vmatprep.subr.mxu0 0.0
      %587 = vmatpush2.msra.mxu0 0.0
      %588 = vmatprep.subr.mxu0 0.0
      %589 = vmatpush2.msra.mxu0 0.0
      %590 = vmatprep.subr.mxu0 0.0
      %591 = vmatpush2.msra.mxu0 0.0
      %592 = vmatprep.subr.mxu0 0.0
      %593 = vmatpush2.msra.mxu0 0.0
      %594 = vmatprep.subr.mxu0 0.0
      %595 = vmatpush2.msra.mxu0 0.0
      %596 = vmatprep.subr.mxu0 0.0
      %597 = vmatpush2.msra.mxu0 0.0
      %598 = vmatprep.subr.mxu0 0.0
      %599 = vmatpush2.msra.mxu0 0.0
      %600 = vmatprep.subr.mxu0 0.0
      %601 = vmatpush2.msra.mxu0 0.0
      %602 = vmatprep.subr.mxu0 0.0
      %603 = vmatpush2.msra.mxu0 0.0
      %604 = vmatprep.subr.mxu0 0.0
      %605 = vmatpush2.msra.mxu0 0.0
      %606 = vmatprep.subr.mxu0 0.0
      %607 = vmatpush2.msra.mxu0 0.0
      %608 = vmatprep.subr.mxu0 0.0
      %609 = vmatpush2.msra.mxu0 0.0
      %610 = vmatprep.subr.mxu0 0.0
      %611 = vmatpush2.msra.mxu0 0.0
      %612 = vmatprep.subr.mxu0 0.0
      %613 = vmatpush2.msra.mxu0 0.0
      %614 = vmatprep.subr.mxu0 0.0
      %615 = vmatpush2.msra.mxu0 0.0
      %616 = vmatprep.subr.mxu0 0.0
      %617 = vmatpush2.msra.mxu0 0.0
      %618 = vmatprep.mubr.f32.mxu0 0.0
      %619 = vmatmul.mubr.f32.gmra.mxu0 %v202
      %v620 = vpop.f32.mrf.mxu0
      %v621 = vadd.f32 0.0, %v620
      %v622 = vpop.f32.mrf.mxu0
      %v623 = vadd.f32 0.0, %v622
      %624 = vdwg.mxu0
      %625 = vmatprep.subr.mxu0 0.0
      %626 = vmatpush1.msra.mxu0 0.0
      %627 = vmatprep.subr.mxu0 0.0
      %628 = vmatpush1.msra.mxu0 0.0
      %629 = vmatprep.subr.mxu0 0.0
      %630 = vmatpush1.msra.mxu0 0.0
      %631 = vmatprep.subr.mxu0 0.0
      %632 = vmatpush1.msra.mxu0 0.0
      %633 = vmatprep.subr.mxu0 0.0
      %634 = vmatpush1.msra.mxu0 0.0
      %635 = vmatprep.subr.mxu0 0.0
      %636 = vmatpush1.msra.mxu0 0.0
      %637 = vmatprep.subr.mxu0 0.0
      %638 = vmatpush1.msra.mxu0 0.0
      %639 = vmatprep.subr.mxu0 0.0
      %640 = vmatpush1.msra.mxu0 0.0
      %641 = vmatprep.subr.mxu0 0.0
      %642 = vmatpush1.msra.mxu0 0.0
      %643 = vmatprep.subr.mxu0 0.0
      %644 = vmatpush1.msra.mxu0 0.0
      %645 = vmatprep.subr.mxu0 0.0
      %646 = vmatpush1.msra.mxu0 0.0
      %647 = vmatprep.subr.mxu0 %v392
      %648 = vmatpush1.msra.mxu0 %v389
      %649 = vmatprep.subr.mxu0 %v335
      %650 = vmatpush1.msra.mxu0 %v334
      %651 = vmatprep.subr.mxu0 %v321
      %652 = vmatpush1.msra.mxu0 %v320
      %653 = vmatprep.subr.mxu0 %v307
      %654 = vmatpush1.msra.mxu0 %v306
      %655 = vmatprep.subr.mxu0 %v293
      %656 = vmatpush1.msra.mxu0 %v292
      %657 = vmatprep.subr.mxu0 0.0
      %658 = vmatpush2.msra.mxu0 0.0
      %659 = vmatprep.subr.mxu0 0.0
      %660 = vmatpush2.msra.mxu0 0.0
      %661 = vmatprep.subr.mxu0 0.0
      %662 = vmatpush2.msra.mxu0 0.0
      %663 = vmatprep.subr.mxu0 0.0
      %664 = vmatpush2.msra.mxu0 0.0
      %665 = vmatprep.subr.mxu0 0.0
      %666 = vmatpush2.msra.mxu0 0.0
      %667 = vmatprep.subr.mxu0 0.0
      %668 = vmatpush2.msra.mxu0 0.0
      %669 = vmatprep.subr.mxu0 0.0
      %670 = vmatpush2.msra.mxu0 0.0
      %671 = vmatprep.subr.mxu0 0.0
      %672 = vmatpush2.msra.mxu0 0.0
      %673 = vmatprep.subr.mxu0 0.0
      %674 = vmatpush2.msra.mxu0 0.0
      %675 = vmatprep.subr.mxu0 0.0
      %676 = vmatpush2.msra.mxu0 0.0
      %677 = vmatprep.subr.mxu0 0.0
      %678 = vmatpush2.msra.mxu0 0.0
      %679 = vmatprep.subr.mxu0 0.0
      %680 = vmatpush2.msra.mxu0 0.0
      %681 = vmatprep.subr.mxu0 0.0
      %682 = vmatpush2.msra.mxu0 0.0
      %683 = vmatprep.subr.mxu0 0.0
      %684 = vmatpush2.msra.mxu0 0.0
      %685 = vmatprep.subr.mxu0 0.0
      %686 = vmatpush2.msra.mxu0 0.0
      %687 = vmatprep.subr.mxu0 0.0
      %688 = vmatpush2.msra.mxu0 0.0
      %689 = vmatprep.mubr.f32.mxu0 0.0
      %690 = vmatmul.mubr.f32.gmra.mxu0 %v202
      %v691 = vpop.f32.mrf.mxu0
      %v692 = vadd.f32 0.0, %v691
      %v693 = vpop.f32.mrf.mxu0
      %v694 = vadd.f32 0.0, %v693
      %695 = vdwg.mxu0
      %696 = vmatprep.subr.mxu0 0.0
      %697 = vmatpush1.msra.mxu0 0.0
      %698 = vmatprep.subr.mxu0 0.0
      %699 = vmatpush1.msra.mxu0 0.0
      %700 = vmatprep.subr.mxu0 0.0
      %701 = vmatpush1.msra.mxu0 0.0
      %702 = vmatprep.subr.mxu0 0.0
      %703 = vmatpush1.msra.mxu0 0.0
      %704 = vmatprep.subr.mxu0 0.0
      %705 = vmatpush1.msra.mxu0 0.0
      %706 = vmatprep.subr.mxu0 0.0
      %707 = vmatpush1.msra.mxu0 0.0
      %708 = vmatprep.subr.mxu0 0.0
      %709 = vmatpush1.msra.mxu0 0.0
      %710 = vmatprep.subr.mxu0 0.0
      %711 = vmatpush1.msra.mxu0 0.0
      %712 = vmatprep.subr.mxu0 0.0
      %713 = vmatpush1.msra.mxu0 0.0
      %714 = vmatprep.subr.mxu0 0.0
      %715 = vmatpush1.msra.mxu0 0.0
      %716 = vmatprep.subr.mxu0 0.0
      %717 = vmatpush1.msra.mxu0 0.0
      %718 = vmatprep.subr.mxu0 %v398
      %719 = vmatpush1.msra.mxu0 %v395
      %720 = vmatprep.subr.mxu0 %v337
      %721 = vmatpush1.msra.mxu0 %v336
      %722 = vmatprep.subr.mxu0 %v323
      %723 = vmatpush1.msra.mxu0 %v322
      %724 = vmatprep.subr.mxu0 %v309
      %725 = vmatpush1.msra.mxu0 %v308
      %726 = vmatprep.subr.mxu0 %v295
      %727 = vmatpush1.msra.mxu0 %v294
      %728 = vmatprep.subr.mxu0 0.0
      %729 = vmatpush2.msra.mxu0 0.0
      %730 = vmatprep.subr.mxu0 0.0
      %731 = vmatpush2.msra.mxu0 0.0
      %732 = vmatprep.subr.mxu0 0.0
      %733 = vmatpush2.msra.mxu0 0.0
      %734 = vmatprep.subr.mxu0 0.0
      %735 = vmatpush2.msra.mxu0 0.0
      %736 = vmatprep.subr.mxu0 0.0
      %737 = vmatpush2.msra.mxu0 0.0
      %738 = vmatprep.subr.mxu0 0.0
      %739 = vmatpush2.msra.mxu0 0.0
      %740 = vmatprep.subr.mxu0 0.0
      %741 = vmatpush2.msra.mxu0 0.0
      %742 = vmatprep.subr.mxu0 0.0
      %743 = vmatpush2.msra.mxu0 0.0
      %744 = vmatprep.subr.mxu0 0.0
      %745 = vmatpush2.msra.mxu0 0.0
      %746 = vmatprep.subr.mxu0 0.0
      %747 = vmatpush2.msra.mxu0 0.0
      %748 = vmatprep.subr.mxu0 0.0
      %749 = vmatpush2.msra.mxu0 0.0
      %750 = vmatprep.subr.mxu0 0.0
      %751 = vmatpush2.msra.mxu0 0.0
      %752 = vmatprep.subr.mxu0 0.0
      %753 = vmatpush2.msra.mxu0 0.0
      %754 = vmatprep.subr.mxu0 0.0
      %755 = vmatpush2.msra.mxu0 0.0
      %756 = vmatprep.subr.mxu0 0.0
      %757 = vmatpush2.msra.mxu0 0.0
      %758 = vmatprep.subr.mxu0 0.0
      %759 = vmatpush2.msra.mxu0 0.0
      %760 = vmatprep.mubr.f32.mxu0 0.0
      %761 = vmatmul.mubr.f32.gmra.mxu0 %v202
      %v762 = vpop.f32.mrf.mxu0
      %v763 = vadd.f32 0.0, %v762
      %v764 = vpop.f32.mrf.mxu0
      %v765 = vadd.f32 0.0, %v764
      %766 = vdwg.mxu0
      %767 = vmatprep.subr.mxu0 0.0
      %768 = vmatpush1.msra.mxu0 0.0
      %769 = vmatprep.subr.mxu0 0.0
      %770 = vmatpush1.msra.mxu0 0.0
      %771 = vmatprep.subr.mxu0 0.0
      %772 = vmatpush1.msra.mxu0 0.0
      %773 = vmatprep.subr.mxu0 0.0
      %774 = vmatpush1.msra.mxu0 0.0
      %775 = vmatprep.subr.mxu0 0.0
      %776 = vmatpush1.msra.mxu0 0.0
      %777 = vmatprep.subr.mxu0 0.0
      %778 = vmatpush1.msra.mxu0 0.0
      %779 = vmatprep.subr.mxu0 0.0
      %780 = vmatpush1.msra.mxu0 0.0
      %781 = vmatprep.subr.mxu0 0.0
      %782 = vmatpush1.msra.mxu0 0.0
      %783 = vmatprep.subr.mxu0 0.0
      %784 = vmatpush1.msra.mxu0 0.0
      %785 = vmatprep.subr.mxu0 0.0
      %786 = vmatpush1.msra.mxu0 0.0
      %787 = vmatprep.subr.mxu0 0.0
      %788 = vmatpush1.msra.mxu0 0.0
      %789 = vmatprep.subr.mxu0 %v404
      %790 = vmatpush1.msra.mxu0 %v401
      %791 = vmatprep.subr.mxu0 %v339
      %792 = vmatpush1.msra.mxu0 %v338
      %793 = vmatprep.subr.mxu0 %v325
      %794 = vmatpush1.msra.mxu0 %v324
      %795 = vmatprep.subr.mxu0 %v311
      %796 = vmatpush1.msra.mxu0 %v310
      %797 = vmatprep.subr.mxu0 %v297
      %798 = vmatpush1.msra.mxu0 %v296
      %799 = vmatprep.subr.mxu0 0.0
      %800 = vmatpush2.msra.mxu0 0.0
      %801 = vmatprep.subr.mxu0 0.0
      %802 = vmatpush2.msra.mxu0 0.0
      %803 = vmatprep.subr.mxu0 0.0
      %804 = vmatpush2.msra.mxu0 0.0
      %805 = vmatprep.subr.mxu0 0.0
      %806 = vmatpush2.msra.mxu0 0.0
      %807 = vmatprep.subr.mxu0 0.0
      %808 = vmatpush2.msra.mxu0 0.0
      %809 = vmatprep.subr.mxu0 0.0
      %810 = vmatpush2.msra.mxu0 0.0
      %811 = vmatprep.subr.mxu0 0.0
      %812 = vmatpush2.msra.mxu0 0.0
      %813 = vmatprep.subr.mxu0 0.0
      %814 = vmatpush2.msra.mxu0 0.0
      %815 = vmatprep.subr.mxu0 0.0
      %816 = vmatpush2.msra.mxu0 0.0
      %817 = vmatprep.subr.mxu0 0.0
      %818 = vmatpush2.msra.mxu0 0.0
      %819 = vmatprep.subr.mxu0 0.0
      %820 = vmatpush2.msra.mxu0 0.0
      %821 = vmatprep.subr.mxu0 0.0
      %822 = vmatpush2.msra.mxu0 0.0
      %823 = vmatprep.subr.mxu0 0.0
      %824 = vmatpush2.msra.mxu0 0.0
      %825 = vmatprep.subr.mxu0 0.0
      %826 = vmatpush2.msra.mxu0 0.0
      %827 = vmatprep.subr.mxu0 0.0
      %828 = vmatpush2.msra.mxu0 0.0
      %829 = vmatprep.subr.mxu0 0.0
      %830 = vmatpush2.msra.mxu0 0.0
      %831 = vmatprep.mubr.f32.mxu0 0.0
      %832 = vmatmul.mubr.f32.gmra.mxu0 %v202
      %v833 = vpop.f32.mrf.mxu0
      %v834 = vadd.f32 0.0, %v833
      %v835 = vpop.f32.mrf.mxu0
      %v836 = vadd.f32 0.0, %v835
      %837 = vdwg.mxu0
      %838 = vmatprep.subr.mxu0 0.0
      %839 = vmatpush1.msra.mxu0 0.0
      %840 = vmatprep.subr.mxu0 0.0
      %841 = vmatpush1.msra.mxu0 0.0
      %842 = vmatprep.subr.mxu0 0.0
      %843 = vmatpush1.msra.mxu0 0.0
      %844 = vmatprep.subr.mxu0 0.0
      %845 = vmatpush1.msra.mxu0 0.0
      %846 = vmatprep.subr.mxu0 0.0
      %847 = vmatpush1.msra.mxu0 0.0
      %848 = vmatprep.subr.mxu0 0.0
      %849 = vmatpush1.msra.mxu0 0.0
      %850 = vmatprep.subr.mxu0 0.0
      %851 = vmatpush1.msra.mxu0 0.0
      %852 = vmatprep.subr.mxu0 0.0
      %853 = vmatpush1.msra.mxu0 0.0
      %854 = vmatprep.subr.mxu0 0.0
      %855 = vmatpush1.msra.mxu0 0.0
      %856 = vmatprep.subr.mxu0 0.0
      %857 = vmatpush1.msra.mxu0 0.0
      %858 = vmatprep.subr.mxu0 0.0
      %859 = vmatpush1.msra.mxu0 0.0
      %860 = vmatprep.subr.mxu0 %v410
      %861 = vmatpush1.msra.mxu0 %v407
      %862 = vmatprep.subr.mxu0 %v341
      %863 = vmatpush1.msra.mxu0 %v340
      %864 = vmatprep.subr.mxu0 %v327
      %865 = vmatpush1.msra.mxu0 %v326
      %866 = vmatprep.subr.mxu0 %v313
      %867 = vmatpush1.msra.mxu0 %v312
      %868 = vmatprep.subr.mxu0 %v299
      %869 = vmatpush1.msra.mxu0 %v298
      %870 = vmatprep.subr.mxu0 0.0
      %871 = vmatpush2.msra.mxu0 0.0
      %872 = vmatprep.subr.mxu0 0.0
      %873 = vmatpush2.msra.mxu0 0.0
      %874 = vmatprep.subr.mxu0 0.0
      %875 = vmatpush2.msra.mxu0 0.0
      %876 = vmatprep.subr.mxu0 0.0
      %877 = vmatpush2.msra.mxu0 0.0
      %878 = vmatprep.subr.mxu0 0.0
      %879 = vmatpush2.msra.mxu0 0.0
      %880 = vmatprep.subr.mxu0 0.0
      %881 = vmatpush2.msra.mxu0 0.0
      %882 = vmatprep.subr.mxu0 0.0
      %883 = vmatpush2.msra.mxu0 0.0
      %884 = vmatprep.subr.mxu0 0.0
      %885 = vmatpush2.msra.mxu0 0.0
      %886 = vmatprep.subr.mxu0 0.0
      %887 = vmatpush2.msra.mxu0 0.0
      %888 = vmatprep.subr.mxu0 0.0
      %889 = vmatpush2.msra.mxu0 0.0
      %890 = vmatprep.subr.mxu0 0.0
      %891 = vmatpush2.msra.mxu0 0.0
      %892 = vmatprep.subr.mxu0 0.0
      %893 = vmatpush2.msra.mxu0 0.0
      %894 = vmatprep.subr.mxu0 0.0
      %895 = vmatpush2.msra.mxu0 0.0
      %896 = vmatprep.subr.mxu0 0.0
      %897 = vmatpush2.msra.mxu0 0.0
      %898 = vmatprep.subr.mxu0 0.0
      %899 = vmatpush2.msra.mxu0 0.0
      %900 = vmatprep.subr.mxu0 0.0
      %901 = vmatpush2.msra.mxu0 0.0
      %902 = vmatprep.mubr.f32.mxu0 0.0
      %903 = vmatmul.mubr.f32.gmra.mxu0 %v202
      %v904 = vpop.f32.mrf.mxu0
      %v905 = vadd.f32 0.0, %v904
      %v906 = vpop.f32.mrf.mxu0
      %v907 = vadd.f32 0.0, %v906
      %908 = vdwg.mxu0
      %v909 = vadd.f32 %v356, %v479
      %v910 = vadd.f32 %v357, %v481
      %v911 = vadd.f32 %v358, %v550
      %v912 = vadd.f32 %v359, %v552
      %v913 = vadd.f32 %v360, %v621
      %v914 = vadd.f32 %v361, %v623
      %v915 = vadd.f32 %v362, %v692
      %v916 = vadd.f32 %v363, %v694
      %v917 = vadd.f32 %v364, %v763
      %v918 = vadd.f32 %v365, %v765
      %v919 = vadd.f32 %v366, %v834
      %v920 = vadd.f32 %v367, %v836
      %v921 = vadd.f32 %v368, %v905
      %v922 = vadd.f32 %v369, %v907
      %923 = vst [vmem:[#allocation2 + $0x10] sm:$0xff] %v909
      %924 = vst [vmem:[#allocation2 + $0x18] sm:$0xff] %v910
      %925 = vst [vmem:[#allocation2 + $0x20] sm:$0xff] %v911
      %926 = vst [vmem:[#allocation2 + $0x28] sm:$0xff] %v912
      %927 = vst [vmem:[#allocation2 + $0x30] sm:$0xff] %v913
      %928 = vst [vmem:[#allocation2 + $0x38] sm:$0xff] %v914
      %929 = vst [vmem:[#allocation2 + $0x40] sm:$0xff] %v915
      %930 = vst [vmem:[#allocation2 + $0x48] sm:$0xff] %v916
      %931 = vst [vmem:[#allocation2 + $0x50] sm:$0xff] %v917
      %932 = vst [vmem:[#allocation2 + $0x58] sm:$0xff] %v918
      %933 = vst [vmem:[#allocation2 + $0x60] sm:$0xff] %v919
      %934 = vst [vmem:[#allocation2 + $0x68] sm:$0xff] %v920
      %935 = vst [vmem:[#allocation2 + $0x70] sm:$0xff] %v921
      %936 = vst [vmem:[#allocation2 + $0x78] sm:$0xff] %v922
      %s937 = scalar_lea.vmem %s1, 8
      %v938 = vld [vmem:[%s937] sm:$0xff]
      %v939 = vld [vmem:[%s165] sm:$0xff]
      %v940 = vld [vmem:[%s165 + $0x8] sm:$0xff]
      %v941 = vld [vmem:[%s165 + $0x10] sm:$0xff]
      %v942 = vld [vmem:[%s165 + $0x18] sm:$0xff]
      %v943 = vld [vmem:[%s165 + $0x20] sm:$0xff]
      %v944 = vld [vmem:[%s165 + $0x28] sm:$0xff]
      %v945 = vld [vmem:[%s165 + $0x30] sm:$0xff]
      %v946 = vld [vmem:[%s165 + $0x38] sm:$0xff]
      %v947 = vld [vmem:[%s165 + $0x40] sm:$0xff]
      %v948 = vld [vmem:[%s165 + $0x48] sm:$0xff]
      %v949 = vld [vmem:[%s165 + $0x50] sm:$0xff]
      %v950 = vld [vmem:[%s165 + $0x58] sm:$0xff]
      %v951 = vld [vmem:[%s165 + $0x60] sm:$0xff]
      %v952 = vld [vmem:[%s165 + $0x68] sm:$0xff]
      %v953 = vld [vmem:[%s165 + $0x70] sm:$0xff]
      %v954 = vld [vmem:[%s165 + $0x78] sm:$0xff]
      %v955 = vld [vmem:[%s165 + $0x80] sm:$0xff]
      %v956 = vld [vmem:[%s165 + $0x88] sm:$0xff]
      %v957 = vld [vmem:[%s165 + $0x90] sm:$0xff]
      %v958 = vld [vmem:[%s165 + $0x98] sm:$0xff]
      %v959 = vld [vmem:[%s165 + $0xa0] sm:$0xff]
      %v960 = vld [vmem:[%s165 + $0xa8] sm:$0xff]
      %v961 = vld [vmem:[%s165 + $0xb0] sm:$0xff]
      %v962 = vld [vmem:[%s165 + $0xb8] sm:$0xff]
      %v963 = vld [vmem:[%s165 + $0xc0] sm:$0xff]
      %v964 = vld [vmem:[%s165 + $0xc8] sm:$0xff]
      %v965 = vld [vmem:[%s165 + $0xd0] sm:$0xff]
      %v966 = vld [vmem:[%s165 + $0xd8] sm:$0xff]
      %v967 = vld [vmem:[%s165 + $0xe0] sm:$0xff]
      %v968 = vld [vmem:[%s165 + $0xe8] sm:$0xff]
      %v969 = vld [vmem:[%s165 + $0xf0] sm:$0xff]
      %v970 = vld [vmem:[%s165 + $0xf8] sm:$0xff]
      %v971 = vld [vmem:[%s165 + $0x100] sm:$0xff]
      %v972 = vld [vmem:[%s165 + $0x108] sm:$0xff]
      %v973 = vld [vmem:[%s165 + $0x110] sm:$0xff]
      %v974 = vld [vmem:[%s165 + $0x118] sm:$0xff]
      %v975 = vld [vmem:[%s165 + $0x120] sm:$0xff]
      %v976 = vld [vmem:[%s165 + $0x128] sm:$0xff]
      %v977 = vld [vmem:[%s165 + $0x130] sm:$0xff]
      %v978 = vld [vmem:[%s165 + $0x138] sm:$0xff]
      %v979 = vld [vmem:[%s165 + $0x140] sm:$0xff]
      %v980 = vld [vmem:[%s165 + $0x148] sm:$0xff]
      %v981 = vld [vmem:[%s165 + $0x150] sm:$0xff]
      %v982 = vld [vmem:[%s165 + $0x158] sm:$0xff]
      %v983 = vld [vmem:[%s165 + $0x160] sm:$0xff]
      %v984 = vld [vmem:[%s165 + $0x168] sm:$0xff]
      %v985 = vld [vmem:[%s165 + $0x170] sm:$0xff]
      %v986 = vld [vmem:[%s165 + $0x178] sm:$0xff]
      %v987 = vld [vmem:[%s165 + $0x180] sm:$0xff]
      %v988 = vld [vmem:[%s165 + $0x188] sm:$0xff]
      %v989 = vld [vmem:[%s165 + $0x190] sm:$0xff]
      %v990 = vld [vmem:[%s165 + $0x198] sm:$0xff]
      %v991 = vld [vmem:[%s165 + $0x1a0] sm:$0xff]
      %v992 = vld [vmem:[%s165 + $0x1a8] sm:$0xff]
      %v993 = vld [vmem:[%s165 + $0x1b0] sm:$0xff]
      %v994 = vld [vmem:[%s165 + $0x1b8] sm:$0xff]
      %v995 = vld [vmem:[%s165 + $0x1c0] sm:$0xff]
      %v996 = vld [vmem:[%s165 + $0x1c8] sm:$0xff]
      %v997 = vld [vmem:[%s165 + $0x1d0] sm:$0xff]
      %v998 = vld [vmem:[%s165 + $0x1d8] sm:$0xff]
      %v999 = vld [vmem:[%s165 + $0x1e0] sm:$0xff]
      %v1000 = vld [vmem:[%s165 + $0x1e8] sm:$0xff]
      %v1001 = vld [vmem:[%s165 + $0x1f0] sm:$0xff]
      %v1002 = vld [vmem:[%s165 + $0x1f8] sm:$0xff]
      %v1003 = vld [vmem:[%s165 + $0x200] sm:$0xf]
      %v1004 = vld [vmem:[%s165 + $0x208] sm:$0xf]
      %v1005 = vld [vmem:[%s165 + $0x210] sm:$0xf]
      %v1006 = vld [vmem:[%s165 + $0x218] sm:$0xf]
      %v1007 = vld [vmem:[%s165 + $0x220] sm:$0xf]
      %v1008 = vld [vmem:[%s165 + $0x228] sm:$0xf]
      %v1009 = vld [vmem:[%s165 + $0x230] sm:$0xf]
      %v1010 = vld [vmem:[%s165 + $0x238] sm:$0xf]
      %v1011 = vld [vmem:[%s165 + $0x240] sm:$0xf]
      %v1012 = vld [vmem:[%s165 + $0x248] sm:$0xf]
      %v1013 = vld [vmem:[%s165 + $0x250] sm:$0xf]
      %v1014 = vld [vmem:[%s165 + $0x258] sm:$0xf]
      %v1015 = vld [vmem:[%s165 + $0x260] sm:$0xf]
      %v1016 = vld [vmem:[%s165 + $0x268] sm:$0xf]
      %v1017 = vld [vmem:[%s165 + $0x270] sm:$0xf]
      %v1018 = vld [vmem:[%s165 + $0x278] sm:$0xf]
      %v1019 = vld [vmem:[#allocation2] sm:$0xff]
      %v1020 = vld [vmem:[#allocation2 + $0x8] sm:$0xff]
      %v1021 = vld [vmem:[#allocation2 + $0x10] sm:$0xff]
      %v1022 = vld [vmem:[#allocation2 + $0x18] sm:$0xff]
      %v1023 = vld [vmem:[#allocation2 + $0x20] sm:$0xff]
      %v1024 = vld [vmem:[#allocation2 + $0x28] sm:$0xff]
      %v1025 = vld [vmem:[#allocation2 + $0x30] sm:$0xff]
      %v1026 = vld [vmem:[#allocation2 + $0x38] sm:$0xff]
      %v1027 = vld [vmem:[#allocation2 + $0x40] sm:$0xff]
      %v1028 = vld [vmem:[#allocation2 + $0x48] sm:$0xff]
      %v1029 = vld [vmem:[#allocation2 + $0x50] sm:$0xff]
      %v1030 = vld [vmem:[#allocation2 + $0x58] sm:$0xff]
      %v1031 = vld [vmem:[#allocation2 + $0x60] sm:$0xff]
      %v1032 = vld [vmem:[#allocation2 + $0x68] sm:$0xff]
      %v1033 = vld [vmem:[#allocation2 + $0x70] sm:$0xff]
      %v1034 = vld [vmem:[#allocation2 + $0x78] sm:$0xff]
      %v1036 = vsel %vm200, %v938, 0
      %v1039 = vsel %vm204, %v1003, 0
      %v1042 = vsel %vm204, %v1004, 0
      %v1045 = vsel %vm204, %v1005, 0
      %v1048 = vsel %vm204, %v1006, 0
      %v1051 = vsel %vm204, %v1007, 0
      %v1054 = vsel %vm204, %v1008, 0
      %v1057 = vsel %vm204, %v1009, 0
      %v1060 = vsel %vm204, %v1010, 0
      %v1063 = vsel %vm204, %v1011, 0
      %v1066 = vsel %vm204, %v1012, 0
      %v1069 = vsel %vm204, %v1013, 0
      %v1072 = vsel %vm204, %v1014, 0
      %v1075 = vsel %vm204, %v1015, 0
      %v1078 = vsel %vm204, %v1016, 0
      %v1081 = vsel %vm204, %v1017, 0
      %v1084 = vsel %vm204, %v1018, 0
      %1086 = vmatprep.subr.mxu0 0.0
      %1087 = vmatpush1.msra.mxu0 0.0
      %1088 = vmatprep.subr.mxu0 0.0
      %1089 = vmatpush1.msra.mxu0 0.0
      %1090 = vmatprep.subr.mxu0 0.0
      %1091 = vmatpush1.msra.mxu0 0.0
      %1092 = vmatprep.subr.mxu0 0.0
      %1093 = vmatpush1.msra.mxu0 0.0
      %1094 = vmatprep.subr.mxu0 0.0
      %1095 = vmatpush1.msra.mxu0 0.0
      %1096 = vmatprep.subr.mxu0 0.0
      %1097 = vmatpush1.msra.mxu0 0.0
      %1098 = vmatprep.subr.mxu0 0.0
      %1099 = vmatpush1.msra.mxu0 0.0
      %1100 = vmatprep.subr.mxu0 0.0
      %1101 = vmatpush1.msra.mxu0 0.0
      %1102 = vmatprep.subr.mxu0 0.0
      %1103 = vmatpush1.msra.mxu0 0.0
      %1104 = vmatprep.subr.mxu0 0.0
      %1105 = vmatpush1.msra.mxu0 0.0
      %1106 = vmatprep.subr.mxu0 0.0
      %1107 = vmatpush1.msra.mxu0 0.0
      %1108 = vmatprep.subr.mxu0 %v1042
      %1109 = vmatpush1.msra.mxu0 %v1039
      %1110 = vmatprep.subr.mxu0 %v988
      %1111 = vmatpush1.msra.mxu0 %v987
      %1112 = vmatprep.subr.mxu0 %v972
      %1113 = vmatpush1.msra.mxu0 %v971
      %1114 = vmatprep.subr.mxu0 %v956
      %1115 = vmatpush1.msra.mxu0 %v955
      %1116 = vmatprep.subr.mxu0 %v940
      %1117 = vmatpush1.msra.mxu0 %v939
      %1118 = vmatprep.subr.mxu0 0.0
      %1119 = vmatpush2.msra.mxu0 0.0
      %1120 = vmatprep.subr.mxu0 0.0
      %1121 = vmatpush2.msra.mxu0 0.0
      %1122 = vmatprep.subr.mxu0 0.0
      %1123 = vmatpush2.msra.mxu0 0.0
      %1124 = vmatprep.subr.mxu0 0.0
      %1125 = vmatpush2.msra.mxu0 0.0
      %1126 = vmatprep.subr.mxu0 0.0
      %1127 = vmatpush2.msra.mxu0 0.0
      %1128 = vmatprep.subr.mxu0 0.0
      %1129 = vmatpush2.msra.mxu0 0.0
      %1130 = vmatprep.subr.mxu0 0.0
      %1131 = vmatpush2.msra.mxu0 0.0
      %1132 = vmatprep.subr.mxu0 0.0
      %1133 = vmatpush2.msra.mxu0 0.0
      %1134 = vmatprep.subr.mxu0 0.0
      %1135 = vmatpush2.msra.mxu0 0.0
      %1136 = vmatprep.subr.mxu0 0.0
      %1137 = vmatpush2.msra.mxu0 0.0
      %1138 = vmatprep.subr.mxu0 0.0
      %1139 = vmatpush2.msra.mxu0 0.0
      %1140 = vmatprep.subr.mxu0 0.0
      %1141 = vmatpush2.msra.mxu0 0.0
      %1142 = vmatprep.subr.mxu0 0.0
      %1143 = vmatpush2.msra.mxu0 0.0
      %1144 = vmatprep.subr.mxu0 0.0
      %1145 = vmatpush2.msra.mxu0 0.0
      %1146 = vmatprep.subr.mxu0 0.0
      %1147 = vmatpush2.msra.mxu0 0.0
      %1148 = vmatprep.subr.mxu0 0.0
      %1149 = vmatpush2.msra.mxu0 0.0
      %1150 = vmatprep.mubr.f32.mxu0 0.0
      %1151 = vmatmul.mubr.f32.gmra.mxu0 %v1036
      %v1152 = vpop.f32.mrf.mxu0
      %v1153 = vadd.f32 0.0, %v1152
      %v1154 = vpop.f32.mrf.mxu0
      %v1155 = vadd.f32 0.0, %v1154
      %1156 = vdwg.mxu0
      %1157 = vmatprep.subr.mxu0 0.0
      %1158 = vmatpush1.msra.mxu0 0.0
      %1159 = vmatprep.subr.mxu0 0.0
      %1160 = vmatpush1.msra.mxu0 0.0
      %1161 = vmatprep.subr.mxu0 0.0
      %1162 = vmatpush1.msra.mxu0 0.0
      %1163 = vmatprep.subr.mxu0 0.0
      %1164 = vmatpush1.msra.mxu0 0.0
      %1165 = vmatprep.subr.mxu0 0.0
      %1166 = vmatpush1.msra.mxu0 0.0
      %1167 = vmatprep.subr.mxu0 0.0
      %1168 = vmatpush1.msra.mxu0 0.0
      %1169 = vmatprep.subr.mxu0 0.0
      %1170 = vmatpush1.msra.mxu0 0.0
      %1171 = vmatprep.subr.mxu0 0.0
      %1172 = vmatpush1.msra.mxu0 0.0
      %1173 = vmatprep.subr.mxu0 0.0
      %1174 = vmatpush1.msra.mxu0 0.0
      %1175 = vmatprep.subr.mxu0 0.0
      %1176 = vmatpush1.msra.mxu0 0.0
      %1177 = vmatprep.subr.mxu0 0.0
      %1178 = vmatpush1.msra.mxu0 0.0
      %1179 = vmatprep.subr.mxu0 %v1048
      %1180 = vmatpush1.msra.mxu0 %v1045
      %1181 = vmatprep.subr.mxu0 %v990
      %1182 = vmatpush1.msra.mxu0 %v989
      %1183 = vmatprep.subr.mxu0 %v974
      %1184 = vmatpush1.msra.mxu0 %v973
      %1185 = vmatprep.subr.mxu0 %v958
      %1186 = vmatpush1.msra.mxu0 %v957
      %1187 = vmatprep.subr.mxu0 %v942
      %1188 = vmatpush1.msra.mxu0 %v941
      %1189 = vmatprep.subr.mxu0 0.0
      %1190 = vmatpush2.msra.mxu0 0.0
      %1191 = vmatprep.subr.mxu0 0.0
      %1192 = vmatpush2.msra.mxu0 0.0
      %1193 = vmatprep.subr.mxu0 0.0
      %1194 = vmatpush2.msra.mxu0 0.0
      %1195 = vmatprep.subr.mxu0 0.0
      %1196 = vmatpush2.msra.mxu0 0.0
      %1197 = vmatprep.subr.mxu0 0.0
      %1198 = vmatpush2.msra.mxu0 0.0
      %1199 = vmatprep.subr.mxu0 0.0
      %1200 = vmatpush2.msra.mxu0 0.0
      %1201 = vmatprep.subr.mxu0 0.0
      %1202 = vmatpush2.msra.mxu0 0.0
      %1203 = vmatprep.subr.mxu0 0.0
      %1204 = vmatpush2.msra.mxu0 0.0
      %1205 = vmatprep.subr.mxu0 0.0
      %1206 = vmatpush2.msra.mxu0 0.0
      %1207 = vmatprep.subr.mxu0 0.0
      %1208 = vmatpush2.msra.mxu0 0.0
      %1209 = vmatprep.subr.mxu0 0.0
      %1210 = vmatpush2.msra.mxu0 0.0
      %1211 = vmatprep.subr.mxu0 0.0
      %1212 = vmatpush2.msra.mxu0 0.0
      %1213 = vmatprep.subr.mxu0 0.0
      %1214 = vmatpush2.msra.mxu0 0.0
      %1215 = vmatprep.subr.mxu0 0.0
      %1216 = vmatpush2.msra.mxu0 0.0
      %1217 = vmatprep.subr.mxu0 0.0
      %1218 = vmatpush2.msra.mxu0 0.0
      %1219 = vmatprep.subr.mxu0 0.0
      %1220 = vmatpush2.msra.mxu0 0.0
      %1221 = vmatprep.mubr.f32.mxu0 0.0
      %1222 = vmatmul.mubr.f32.gmra.mxu0 %v1036
      %v1223 = vpop.f32.mrf.mxu0
      %v1224 = vadd.f32 0.0, %v1223
      %v1225 = vpop.f32.mrf.mxu0
      %v1226 = vadd.f32 0.0, %v1225
      %1227 = vdwg.mxu0
      %1228 = vmatprep.subr.mxu0 0.0
      %1229 = vmatpush1.msra.mxu0 0.0
      %1230 = vmatprep.subr.mxu0 0.0
      %1231 = vmatpush1.msra.mxu0 0.0
      %1232 = vmatprep.subr.mxu0 0.0
      %1233 = vmatpush1.msra.mxu0 0.0
      %1234 = vmatprep.subr.mxu0 0.0
      %1235 = vmatpush1.msra.mxu0 0.0
      %1236 = vmatprep.subr.mxu0 0.0
      %1237 = vmatpush1.msra.mxu0 0.0
      %1238 = vmatprep.subr.mxu0 0.0
      %1239 = vmatpush1.msra.mxu0 0.0
      %1240 = vmatprep.subr.mxu0 0.0
      %1241 = vmatpush1.msra.mxu0 0.0
      %1242 = vmatprep.subr.mxu0 0.0
      %1243 = vmatpush1.msra.mxu0 0.0
      %1244 = vmatprep.subr.mxu0 0.0
      %1245 = vmatpush1.msra.mxu0 0.0
      %1246 = vmatprep.subr.mxu0 0.0
      %1247 = vmatpush1.msra.mxu0 0.0
      %1248 = vmatprep.subr.mxu0 0.0
      %1249 = vmatpush1.msra.mxu0 0.0
      %1250 = vmatprep.subr.mxu0 %v1054
      %1251 = vmatpush1.msra.mxu0 %v1051
      %1252 = vmatprep.subr.mxu0 %v992
      %1253 = vmatpush1.msra.mxu0 %v991
      %1254 = vmatprep.subr.mxu0 %v976
      %1255 = vmatpush1.msra.mxu0 %v975
      %1256 = vmatprep.subr.mxu0 %v960
      %1257 = vmatpush1.msra.mxu0 %v959
      %1258 = vmatprep.subr.mxu0 %v944
      %1259 = vmatpush1.msra.mxu0 %v943
      %1260 = vmatprep.subr.mxu0 0.0
      %1261 = vmatpush2.msra.mxu0 0.0
      %1262 = vmatprep.subr.mxu0 0.0
      %1263 = vmatpush2.msra.mxu0 0.0
      %1264 = vmatprep.subr.mxu0 0.0
      %1265 = vmatpush2.msra.mxu0 0.0
      %1266 = vmatprep.subr.mxu0 0.0
      %1267 = vmatpush2.msra.mxu0 0.0
      %1268 = vmatprep.subr.mxu0 0.0
      %1269 = vmatpush2.msra.mxu0 0.0
      %1270 = vmatprep.subr.mxu0 0.0
      %1271 = vmatpush2.msra.mxu0 0.0
      %1272 = vmatprep.subr.mxu0 0.0
      %1273 = vmatpush2.msra.mxu0 0.0
      %1274 = vmatprep.subr.mxu0 0.0
      %1275 = vmatpush2.msra.mxu0 0.0
      %1276 = vmatprep.subr.mxu0 0.0
      %1277 = vmatpush2.msra.mxu0 0.0
      %1278 = vmatprep.subr.mxu0 0.0
      %1279 = vmatpush2.msra.mxu0 0.0
      %1280 = vmatprep.subr.mxu0 0.0
      %1281 = vmatpush2.msra.mxu0 0.0
      %1282 = vmatprep.subr.mxu0 0.0
      %1283 = vmatpush2.msra.mxu0 0.0
      %1284 = vmatprep.subr.mxu0 0.0
      %1285 = vmatpush2.msra.mxu0 0.0
      %1286 = vmatprep.subr.mxu0 0.0
      %1287 = vmatpush2.msra.mxu0 0.0
      %1288 = vmatprep.subr.mxu0 0.0
      %1289 = vmatpush2.msra.mxu0 0.0
      %1290 = vmatprep.subr.mxu0 0.0
      %1291 = vmatpush2.msra.mxu0 0.0
      %1292 = vmatprep.mubr.f32.mxu0 0.0
      %1293 = vmatmul.mubr.f32.gmra.mxu0 %v1036
      %v1294 = vpop.f32.mrf.mxu0
      %v1295 = vadd.f32 0.0, %v1294
      %v1296 = vpop.f32.mrf.mxu0
      %v1297 = vadd.f32 0.0, %v1296
      %1298 = vdwg.mxu0
      %1299 = vmatprep.subr.mxu0 0.0
      %1300 = vmatpush1.msra.mxu0 0.0
      %1301 = vmatprep.subr.mxu0 0.0
      %1302 = vmatpush1.msra.mxu0 0.0
      %1303 = vmatprep.subr.mxu0 0.0
      %1304 = vmatpush1.msra.mxu0 0.0
      %1305 = vmatprep.subr.mxu0 0.0
      %1306 = vmatpush1.msra.mxu0 0.0
      %1307 = vmatprep.subr.mxu0 0.0
      %1308 = vmatpush1.msra.mxu0 0.0
      %1309 = vmatprep.subr.mxu0 0.0
      %1310 = vmatpush1.msra.mxu0 0.0
      %1311 = vmatprep.subr.mxu0 0.0
      %1312 = vmatpush1.msra.mxu0 0.0
      %1313 = vmatprep.subr.mxu0 0.0
      %1314 = vmatpush1.msra.mxu0 0.0
      %1315 = vmatprep.subr.mxu0 0.0
      %1316 = vmatpush1.msra.mxu0 0.0
      %1317 = vmatprep.subr.mxu0 0.0
      %1318 = vmatpush1.msra.mxu0 0.0
      %1319 = vmatprep.subr.mxu0 0.0
      %1320 = vmatpush1.msra.mxu0 0.0
      %1321 = vmatprep.subr.mxu0 %v1060
      %1322 = vmatpush1.msra.mxu0 %v1057
      %1323 = vmatprep.subr.mxu0 %v994
      %1324 = vmatpush1.msra.mxu0 %v993
      %1325 = vmatprep.subr.mxu0 %v978
      %1326 = vmatpush1.msra.mxu0 %v977
      %1327 = vmatprep.subr.mxu0 %v962
      %1328 = vmatpush1.msra.mxu0 %v961
      %1329 = vmatprep.subr.mxu0 %v946
      %1330 = vmatpush1.msra.mxu0 %v945
      %1331 = vmatprep.subr.mxu0 0.0
      %1332 = vmatpush2.msra.mxu0 0.0
      %1333 = vmatprep.subr.mxu0 0.0
      %1334 = vmatpush2.msra.mxu0 0.0
      %1335 = vmatprep.subr.mxu0 0.0
      %1336 = vmatpush2.msra.mxu0 0.0
      %1337 = vmatprep.subr.mxu0 0.0
      %1338 = vmatpush2.msra.mxu0 0.0
      %1339 = vmatprep.subr.mxu0 0.0
      %1340 = vmatpush2.msra.mxu0 0.0
      %1341 = vmatprep.subr.mxu0 0.0
      %1342 = vmatpush2.msra.mxu0 0.0
      %1343 = vmatprep.subr.mxu0 0.0
      %1344 = vmatpush2.msra.mxu0 0.0
      %1345 = vmatprep.subr.mxu0 0.0
      %1346 = vmatpush2.msra.mxu0 0.0
      %1347 = vmatprep.subr.mxu0 0.0
      %1348 = vmatpush2.msra.mxu0 0.0
      %1349 = vmatprep.subr.mxu0 0.0
      %1350 = vmatpush2.msra.mxu0 0.0
      %1351 = vmatprep.subr.mxu0 0.0
      %1352 = vmatpush2.msra.mxu0 0.0
      %1353 = vmatprep.subr.mxu0 0.0
      %1354 = vmatpush2.msra.mxu0 0.0
      %1355 = vmatprep.subr.mxu0 0.0
      %1356 = vmatpush2.msra.mxu0 0.0
      %1357 = vmatprep.subr.mxu0 0.0
      %1358 = vmatpush2.msra.mxu0 0.0
      %1359 = vmatprep.subr.mxu0 0.0
      %1360 = vmatpush2.msra.mxu0 0.0
      %1361 = vmatprep.subr.mxu0 0.0
      %1362 = vmatpush2.msra.mxu0 0.0
      %1363 = vmatprep.mubr.f32.mxu0 0.0
      %1364 = vmatmul.mubr.f32.gmra.mxu0 %v1036
      %v1365 = vpop.f32.mrf.mxu0
      %v1366 = vadd.f32 0.0, %v1365
      %v1367 = vpop.f32.mrf.mxu0
      %v1368 = vadd.f32 0.0, %v1367
      %1369 = vdwg.mxu0
      %1370 = vmatprep.subr.mxu0 0.0
      %1371 = vmatpush1.msra.mxu0 0.0
      %1372 = vmatprep.subr.mxu0 0.0
      %1373 = vmatpush1.msra.mxu0 0.0
      %1374 = vmatprep.subr.mxu0 0.0
      %1375 = vmatpush1.msra.mxu0 0.0
      %1376 = vmatprep.subr.mxu0 0.0
      %1377 = vmatpush1.msra.mxu0 0.0
      %1378 = vmatprep.subr.mxu0 0.0
      %1379 = vmatpush1.msra.mxu0 0.0
      %1380 = vmatprep.subr.mxu0 0.0
      %1381 = vmatpush1.msra.mxu0 0.0
      %1382 = vmatprep.subr.mxu0 0.0
      %1383 = vmatpush1.msra.mxu0 0.0
      %1384 = vmatprep.subr.mxu0 0.0
      %1385 = vmatpush1.msra.mxu0 0.0
      %1386 = vmatprep.subr.mxu0 0.0
      %1387 = vmatpush1.msra.mxu0 0.0
      %1388 = vmatprep.subr.mxu0 0.0
      %1389 = vmatpush1.msra.mxu0 0.0
      %1390 = vmatprep.subr.mxu0 0.0
      %1391 = vmatpush1.msra.mxu0 0.0
      %1392 = vmatprep.subr.mxu0 %v1066
      %1393 = vmatpush1.msra.mxu0 %v1063
      %1394 = vmatprep.subr.mxu0 %v996
      %1395 = vmatpush1.msra.mxu0 %v995
      %1396 = vmatprep.subr.mxu0 %v980
      %1397 = vmatpush1.msra.mxu0 %v979
      %1398 = vmatprep.subr.mxu0 %v964
      %1399 = vmatpush1.msra.mxu0 %v963
      %1400 = vmatprep.subr.mxu0 %v948
      %1401 = vmatpush1.msra.mxu0 %v947
      %1402 = vmatprep.subr.mxu0 0.0
      %1403 = vmatpush2.msra.mxu0 0.0
      %1404 = vmatprep.subr.mxu0 0.0
      %1405 = vmatpush2.msra.mxu0 0.0
      %1406 = vmatprep.subr.mxu0 0.0
      %1407 = vmatpush2.msra.mxu0 0.0
      %1408 = vmatprep.subr.mxu0 0.0
      %1409 = vmatpush2.msra.mxu0 0.0
      %1410 = vmatprep.subr.mxu0 0.0
      %1411 = vmatpush2.msra.mxu0 0.0
      %1412 = vmatprep.subr.mxu0 0.0
      %1413 = vmatpush2.msra.mxu0 0.0
      %1414 = vmatprep.subr.mxu0 0.0
      %1415 = vmatpush2.msra.mxu0 0.0
      %1416 = vmatprep.subr.mxu0 0.0
      %1417 = vmatpush2.msra.mxu0 0.0
      %1418 = vmatprep.subr.mxu0 0.0
      %1419 = vmatpush2.msra.mxu0 0.0
      %1420 = vmatprep.subr.mxu0 0.0
      %1421 = vmatpush2.msra.mxu0 0.0
      %1422 = vmatprep.subr.mxu0 0.0
      %1423 = vmatpush2.msra.mxu0 0.0
      %1424 = vmatprep.subr.mxu0 0.0
      %1425 = vmatpush2.msra.mxu0 0.0
      %1426 = vmatprep.subr.mxu0 0.0
      %1427 = vmatpush2.msra.mxu0 0.0
      %1428 = vmatprep.subr.mxu0 0.0
      %1429 = vmatpush2.msra.mxu0 0.0
      %1430 = vmatprep.subr.mxu0 0.0
      %1431 = vmatpush2.msra.mxu0 0.0
      %1432 = vmatprep.subr.mxu0 0.0
      %1433 = vmatpush2.msra.mxu0 0.0
      %1434 = vmatprep.mubr.f32.mxu0 0.0
      %1435 = vmatmul.mubr.f32.gmra.mxu0 %v1036
      %v1436 = vpop.f32.mrf.mxu0
      %v1437 = vadd.f32 0.0, %v1436
      %v1438 = vpop.f32.mrf.mxu0
      %v1439 = vadd.f32 0.0, %v1438
      %1440 = vdwg.mxu0
      %1441 = vmatprep.subr.mxu0 0.0
      %1442 = vmatpush1.msra.mxu0 0.0
      %1443 = vmatprep.subr.mxu0 0.0
      %1444 = vmatpush1.msra.mxu0 0.0
      %1445 = vmatprep.subr.mxu0 0.0
      %1446 = vmatpush1.msra.mxu0 0.0
      %1447 = vmatprep.subr.mxu0 0.0
      %1448 = vmatpush1.msra.mxu0 0.0
      %1449 = vmatprep.subr.mxu0 0.0
      %1450 = vmatpush1.msra.mxu0 0.0
      %1451 = vmatprep.subr.mxu0 0.0
      %1452 = vmatpush1.msra.mxu0 0.0
      %1453 = vmatprep.subr.mxu0 0.0
      %1454 = vmatpush1.msra.mxu0 0.0
      %1455 = vmatprep.subr.mxu0 0.0
      %1456 = vmatpush1.msra.mxu0 0.0
      %1457 = vmatprep.subr.mxu0 0.0
      %1458 = vmatpush1.msra.mxu0 0.0
      %1459 = vmatprep.subr.mxu0 0.0
      %1460 = vmatpush1.msra.mxu0 0.0
      %1461 = vmatprep.subr.mxu0 0.0
      %1462 = vmatpush1.msra.mxu0 0.0
      %1463 = vmatprep.subr.mxu0 %v1072
      %1464 = vmatpush1.msra.mxu0 %v1069
      %1465 = vmatprep.subr.mxu0 %v998
      %1466 = vmatpush1.msra.mxu0 %v997
      %1467 = vmatprep.subr.mxu0 %v982
      %1468 = vmatpush1.msra.mxu0 %v981
      %1469 = vmatprep.subr.mxu0 %v966
      %1470 = vmatpush1.msra.mxu0 %v965
      %1471 = vmatprep.subr.mxu0 %v950
      %1472 = vmatpush1.msra.mxu0 %v949
      %1473 = vmatprep.subr.mxu0 0.0
      %1474 = vmatpush2.msra.mxu0 0.0
      %1475 = vmatprep.subr.mxu0 0.0
      %1476 = vmatpush2.msra.mxu0 0.0
      %1477 = vmatprep.subr.mxu0 0.0
      %1478 = vmatpush2.msra.mxu0 0.0
      %1479 = vmatprep.subr.mxu0 0.0
      %1480 = vmatpush2.msra.mxu0 0.0
      %1481 = vmatprep.subr.mxu0 0.0
      %1482 = vmatpush2.msra.mxu0 0.0
      %1483 = vmatprep.subr.mxu0 0.0
      %1484 = vmatpush2.msra.mxu0 0.0
      %1485 = vmatprep.subr.mxu0 0.0
      %1486 = vmatpush2.msra.mxu0 0.0
      %1487 = vmatprep.subr.mxu0 0.0
      %1488 = vmatpush2.msra.mxu0 0.0
      %1489 = vmatprep.subr.mxu0 0.0
      %1490 = vmatpush2.msra.mxu0 0.0
      %1491 = vmatprep.subr.mxu0 0.0
      %1492 = vmatpush2.msra.mxu0 0.0
      %1493 = vmatprep.subr.mxu0 0.0
      %1494 = vmatpush2.msra.mxu0 0.0
      %1495 = vmatprep.subr.mxu0 0.0
      %1496 = vmatpush2.msra.mxu0 0.0
      %1497 = vmatprep.subr.mxu0 0.0
      %1498 = vmatpush2.msra.mxu0 0.0
      %1499 = vmatprep.subr.mxu0 0.0
      %1500 = vmatpush2.msra.mxu0 0.0
      %1501 = vmatprep.subr.mxu0 0.0
      %1502 = vmatpush2.msra.mxu0 0.0
      %1503 = vmatprep.subr.mxu0 0.0
      %1504 = vmatpush2.msra.mxu0 0.0
      %1505 = vmatprep.mubr.f32.mxu0 0.0
      %1506 = vmatmul.mubr.f32.gmra.mxu0 %v1036
      %v1507 = vpop.f32.mrf.mxu0
      %v1508 = vadd.f32 0.0, %v1507
      %v1509 = vpop.f32.mrf.mxu0
      %v1510 = vadd.f32 0.0, %v1509
      %1511 = vdwg.mxu0
      %1512 = vmatprep.subr.mxu0 0.0
      %1513 = vmatpush1.msra.mxu0 0.0
      %1514 = vmatprep.subr.mxu0 0.0
      %1515 = vmatpush1.msra.mxu0 0.0
      %1516 = vmatprep.subr.mxu0 0.0
      %1517 = vmatpush1.msra.mxu0 0.0
      %1518 = vmatprep.subr.mxu0 0.0
      %1519 = vmatpush1.msra.mxu0 0.0
      %1520 = vmatprep.subr.mxu0 0.0
      %1521 = vmatpush1.msra.mxu0 0.0
      %1522 = vmatprep.subr.mxu0 0.0
      %1523 = vmatpush1.msra.mxu0 0.0
      %1524 = vmatprep.subr.mxu0 0.0
      %1525 = vmatpush1.msra.mxu0 0.0
      %1526 = vmatprep.subr.mxu0 0.0
      %1527 = vmatpush1.msra.mxu0 0.0
      %1528 = vmatprep.subr.mxu0 0.0
      %1529 = vmatpush1.msra.mxu0 0.0
      %1530 = vmatprep.subr.mxu0 0.0
      %1531 = vmatpush1.msra.mxu0 0.0
      %1532 = vmatprep.subr.mxu0 0.0
      %1533 = vmatpush1.msra.mxu0 0.0
      %1534 = vmatprep.subr.mxu0 %v1078
      %1535 = vmatpush1.msra.mxu0 %v1075
      %1536 = vmatprep.subr.mxu0 %v1000
      %1537 = vmatpush1.msra.mxu0 %v999
      %1538 = vmatprep.subr.mxu0 %v984
      %1539 = vmatpush1.msra.mxu0 %v983
      %1540 = vmatprep.subr.mxu0 %v968
      %1541 = vmatpush1.msra.mxu0 %v967
      %1542 = vmatprep.subr.mxu0 %v952
      %1543 = vmatpush1.msra.mxu0 %v951
      %1544 = vmatprep.subr.mxu0 0.0
      %1545 = vmatpush2.msra.mxu0 0.0
      %1546 = vmatprep.subr.mxu0 0.0
      %1547 = vmatpush2.msra.mxu0 0.0
      %1548 = vmatprep.subr.mxu0 0.0
      %1549 = vmatpush2.msra.mxu0 0.0
      %1550 = vmatprep.subr.mxu0 0.0
      %1551 = vmatpush2.msra.mxu0 0.0
      %1552 = vmatprep.subr.mxu0 0.0
      %1553 = vmatpush2.msra.mxu0 0.0
      %1554 = vmatprep.subr.mxu0 0.0
      %1555 = vmatpush2.msra.mxu0 0.0
      %1556 = vmatprep.subr.mxu0 0.0
      %1557 = vmatpush2.msra.mxu0 0.0
      %1558 = vmatprep.subr.mxu0 0.0
      %1559 = vmatpush2.msra.mxu0 0.0
      %1560 = vmatprep.subr.mxu0 0.0
      %1561 = vmatpush2.msra.mxu0 0.0
      %1562 = vmatprep.subr.mxu0 0.0
      %1563 = vmatpush2.msra.mxu0 0.0
      %1564 = vmatprep.subr.mxu0 0.0
      %1565 = vmatpush2.msra.mxu0 0.0
      %1566 = vmatprep.subr.mxu0 0.0
      %1567 = vmatpush2.msra.mxu0 0.0
      %1568 = vmatprep.subr.mxu0 0.0
      %1569 = vmatpush2.msra.mxu0 0.0
      %1570 = vmatprep.subr.mxu0 0.0
      %1571 = vmatpush2.msra.mxu0 0.0
      %1572 = vmatprep.subr.mxu0 0.0
      %1573 = vmatpush2.msra.mxu0 0.0
      %1574 = vmatprep.subr.mxu0 0.0
      %1575 = vmatpush2.msra.mxu0 0.0
      %1576 = vmatprep.mubr.f32.mxu0 0.0
      %1577 = vmatmul.mubr.f32.gmra.mxu0 %v1036
      %v1578 = vpop.f32.mrf.mxu0
      %v1579 = vadd.f32 0.0, %v1578
      %v1580 = vpop.f32.mrf.mxu0
      %v1581 = vadd.f32 0.0, %v1580
      %1582 = vdwg.mxu0
      %1583 = vmatprep.subr.mxu0 0.0
      %1584 = vmatpush1.msra.mxu0 0.0
      %1585 = vmatprep.subr.mxu0 0.0
      %1586 = vmatpush1.msra.mxu0 0.0
      %1587 = vmatprep.subr.mxu0 0.0
      %1588 = vmatpush1.msra.mxu0 0.0
      %1589 = vmatprep.subr.mxu0 0.0
      %1590 = vmatpush1.msra.mxu0 0.0
      %1591 = vmatprep.subr.mxu0 0.0
      %1592 = vmatpush1.msra.mxu0 0.0
      %1593 = vmatprep.subr.mxu0 0.0
      %1594 = vmatpush1.msra.mxu0 0.0
      %1595 = vmatprep.subr.mxu0 0.0
      %1596 = vmatpush1.msra.mxu0 0.0
      %1597 = vmatprep.subr.mxu0 0.0
      %1598 = vmatpush1.msra.mxu0 0.0
      %1599 = vmatprep.subr.mxu0 0.0
      %1600 = vmatpush1.msra.mxu0 0.0
      %1601 = vmatprep.subr.mxu0 0.0
      %1602 = vmatpush1.msra.mxu0 0.0
      %1603 = vmatprep.subr.mxu0 0.0
      %1604 = vmatpush1.msra.mxu0 0.0
      %1605 = vmatprep.subr.mxu0 %v1084
      %1606 = vmatpush1.msra.mxu0 %v1081
      %1607 = vmatprep.subr.mxu0 %v1002
      %1608 = vmatpush1.msra.mxu0 %v1001
      %1609 = vmatprep.subr.mxu0 %v986
      %1610 = vmatpush1.msra.mxu0 %v985
      %1611 = vmatprep.subr.mxu0 %v970
      %1612 = vmatpush1.msra.mxu0 %v969
      %1613 = vmatprep.subr.mxu0 %v954
      %1614 = vmatpush1.msra.mxu0 %v953
      %1615 = vmatprep.subr.mxu0 0.0
      %1616 = vmatpush2.msra.mxu0 0.0
      %1617 = vmatprep.subr.mxu0 0.0
      %1618 = vmatpush2.msra.mxu0 0.0
      %1619 = vmatprep.subr.mxu0 0.0
      %1620 = vmatpush2.msra.mxu0 0.0
      %1621 = vmatprep.subr.mxu0 0.0
      %1622 = vmatpush2.msra.mxu0 0.0
      %1623 = vmatprep.subr.mxu0 0.0
      %1624 = vmatpush2.msra.mxu0 0.0
      %1625 = vmatprep.subr.mxu0 0.0
      %1626 = vmatpush2.msra.mxu0 0.0
      %1627 = vmatprep.subr.mxu0 0.0
      %1628 = vmatpush2.msra.mxu0 0.0
      %1629 = vmatprep.subr.mxu0 0.0
      %1630 = vmatpush2.msra.mxu0 0.0
      %1631 = vmatprep.subr.mxu0 0.0
      %1632 = vmatpush2.msra.mxu0 0.0
      %1633 = vmatprep.subr.mxu0 0.0
      %1634 = vmatpush2.msra.mxu0 0.0
      %1635 = vmatprep.subr.mxu0 0.0
      %1636 = vmatpush2.msra.mxu0 0.0
      %1637 = vmatprep.subr.mxu0 0.0
      %1638 = vmatpush2.msra.mxu0 0.0
      %1639 = vmatprep.subr.mxu0 0.0
      %1640 = vmatpush2.msra.mxu0 0.0
      %1641 = vmatprep.subr.mxu0 0.0
      %1642 = vmatpush2.msra.mxu0 0.0
      %1643 = vmatprep.subr.mxu0 0.0
      %1644 = vmatpush2.msra.mxu0 0.0
      %1645 = vmatprep.subr.mxu0 0.0
      %1646 = vmatpush2.msra.mxu0 0.0
      %1647 = vmatprep.mubr.f32.mxu0 0.0
      %1648 = vmatmul.mubr.f32.gmra.mxu0 %v1036
      %v1649 = vpop.f32.mrf.mxu0
      %v1650 = vadd.f32 0.0, %v1649
      %v1651 = vpop.f32.mrf.mxu0
      %v1652 = vadd.f32 0.0, %v1651
      %1653 = vdwg.mxu0
      %v1654 = vadd.f32 %v1019, %v1153
      %v1655 = vadd.f32 %v1020, %v1155
      %v1656 = vadd.f32 %v1021, %v1224
      %v1657 = vadd.f32 %v1022, %v1226
      %v1658 = vadd.f32 %v1023, %v1295
      %v1659 = vadd.f32 %v1024, %v1297
      %v1660 = vadd.f32 %v1025, %v1366
      %v1661 = vadd.f32 %v1026, %v1368
      %v1662 = vadd.f32 %v1027, %v1437
      %v1663 = vadd.f32 %v1028, %v1439
      %v1664 = vadd.f32 %v1029, %v1508
      %v1665 = vadd.f32 %v1030, %v1510
      %v1666 = vadd.f32 %v1031, %v1579
      %v1667 = vadd.f32 %v1032, %v1581
      %v1668 = vadd.f32 %v1033, %v1650
      %v1669 = vadd.f32 %v1034, %v1652
      %1670 = vst [vmem:[#allocation2] sm:$0xff] %v1654
      %1671 = vst [vmem:[#allocation2 + $0x8] sm:$0xff] %v1655
      %1672 = vst [vmem:[#allocation2 + $0x10] sm:$0xff] %v1656
      %1673 = vst [vmem:[#allocation2 + $0x18] sm:$0xff] %v1657
      %1674 = vst [vmem:[#allocation2 + $0x20] sm:$0xff] %v1658
      %1675 = vst [vmem:[#allocation2 + $0x28] sm:$0xff] %v1659
      %1676 = vst [vmem:[#allocation2 + $0x30] sm:$0xff] %v1660
      %1677 = vst [vmem:[#allocation2 + $0x38] sm:$0xff] %v1661
      %1678 = vst [vmem:[#allocation2 + $0x40] sm:$0xff] %v1662
      %1679 = vst [vmem:[#allocation2 + $0x48] sm:$0xff] %v1663
      %1680 = vst [vmem:[#allocation2 + $0x50] sm:$0xff] %v1664
      %1681 = vst [vmem:[#allocation2 + $0x58] sm:$0xff] %v1665
      %1682 = vst [vmem:[#allocation2 + $0x60] sm:$0xff] %v1666
      %1683 = vst [vmem:[#allocation2 + $0x68] sm:$0xff] %v1667
      %1684 = vst [vmem:[#allocation2 + $0x70] sm:$0xff] %v1668
      %1685 = vst [vmem:[#allocation2 + $0x78] sm:$0xff] %v1669
      %s1686 = scalar_lea.vmem %s1, 16
      %v1687 = vld [vmem:[%s1686] sm:$0xff]
      %v1688 = vld [vmem:[%s165 + $0x10] sm:$0xff]
      %v1689 = vld [vmem:[%s165 + $0x18] sm:$0xff]
      %v1690 = vld [vmem:[%s165 + $0x20] sm:$0xff]
      %v1691 = vld [vmem:[%s165 + $0x28] sm:$0xff]
      %v1692 = vld [vmem:[%s165 + $0x30] sm:$0xff]
      %v1693 = vld [vmem:[%s165 + $0x38] sm:$0xff]
      %v1694 = vld [vmem:[%s165 + $0x40] sm:$0xff]
      %v1695 = vld [vmem:[%s165 + $0x48] sm:$0xff]
      %v1696 = vld [vmem:[%s165 + $0x50] sm:$0xff]
      %v1697 = vld [vmem:[%s165 + $0x58] sm:$0xff]
      %v1698 = vld [vmem:[%s165 + $0x60] sm:$0xff]
      %v1699 = vld [vmem:[%s165 + $0x68] sm:$0xff]
      %v1700 = vld [vmem:[%s165 + $0x70] sm:$0xff]
      %v1701 = vld [vmem:[%s165 + $0x78] sm:$0xff]
      %v1702 = vld [vmem:[%s165 + $0x90] sm:$0xff]
      %v1703 = vld [vmem:[%s165 + $0x98] sm:$0xff]
      %v1704 = vld [vmem:[%s165 + $0xa0] sm:$0xff]
      %v1705 = vld [vmem:[%s165 + $0xa8] sm:$0xff]
      %v1706 = vld [vmem:[%s165 + $0xb0] sm:$0xff]
      %v1707 = vld [vmem:[%s165 + $0xb8] sm:$0xff]
      %v1708 = vld [vmem:[%s165 + $0xc0] sm:$0xff]
      %v1709 = vld [vmem:[%s165 + $0xc8] sm:$0xff]
      %v1710 = vld [vmem:[%s165 + $0xd0] sm:$0xff]
      %v1711 = vld [vmem:[%s165 + $0xd8] sm:$0xff]
      %v1712 = vld [vmem:[%s165 + $0xe0] sm:$0xff]
      %v1713 = vld [vmem:[%s165 + $0xe8] sm:$0xff]
      %v1714 = vld [vmem:[%s165 + $0xf0] sm:$0xff]
      %v1715 = vld [vmem:[%s165 + $0xf8] sm:$0xff]
      %v1716 = vld [vmem:[%s165 + $0x110] sm:$0xff]
      %v1717 = vld [vmem:[%s165 + $0x118] sm:$0xff]
      %v1718 = vld [vmem:[%s165 + $0x120] sm:$0xff]
      %v1719 = vld [vmem:[%s165 + $0x128] sm:$0xff]
      %v1720 = vld [vmem:[%s165 + $0x130] sm:$0xff]
      %v1721 = vld [vmem:[%s165 + $0x138] sm:$0xff]
      %v1722 = vld [vmem:[%s165 + $0x140] sm:$0xff]
      %v1723 = vld [vmem:[%s165 + $0x148] sm:$0xff]
      %v1724 = vld [vmem:[%s165 + $0x150] sm:$0xff]
      %v1725 = vld [vmem:[%s165 + $0x158] sm:$0xff]
      %v1726 = vld [vmem:[%s165 + $0x160] sm:$0xff]
      %v1727 = vld [vmem:[%s165 + $0x168] sm:$0xff]
      %v1728 = vld [vmem:[%s165 + $0x170] sm:$0xff]
      %v1729 = vld [vmem:[%s165 + $0x178] sm:$0xff]
      %v1730 = vld [vmem:[%s165 + $0x190] sm:$0xff]
      %v1731 = vld [vmem:[%s165 + $0x198] sm:$0xff]
      %v1732 = vld [vmem:[%s165 + $0x1a0] sm:$0xff]
      %v1733 = vld [vmem:[%s165 + $0x1a8] sm:$0xff]
      %v1734 = vld [vmem:[%s165 + $0x1b0] sm:$0xff]
      %v1735 = vld [vmem:[%s165 + $0x1b8] sm:$0xff]
      %v1736 = vld [vmem:[%s165 + $0x1c0] sm:$0xff]
      %v1737 = vld [vmem:[%s165 + $0x1c8] sm:$0xff]
      %v1738 = vld [vmem:[%s165 + $0x1d0] sm:$0xff]
      %v1739 = vld [vmem:[%s165 + $0x1d8] sm:$0xff]
      %v1740 = vld [vmem:[%s165 + $0x1e0] sm:$0xff]
      %v1741 = vld [vmem:[%s165 + $0x1e8] sm:$0xff]
      %v1742 = vld [vmem:[%s165 + $0x1f0] sm:$0xff]
      %v1743 = vld [vmem:[%s165 + $0x1f8] sm:$0xff]
      %v1744 = vld [vmem:[%s165 + $0x210] sm:$0xf]
      %v1745 = vld [vmem:[%s165 + $0x218] sm:$0xf]
      %v1746 = vld [vmem:[%s165 + $0x220] sm:$0xf]
      %v1747 = vld [vmem:[%s165 + $0x228] sm:$0xf]
      %v1748 = vld [vmem:[%s165 + $0x230] sm:$0xf]
      %v1749 = vld [vmem:[%s165 + $0x238] sm:$0xf]
      %v1750 = vld [vmem:[%s165 + $0x240] sm:$0xf]
      %v1751 = vld [vmem:[%s165 + $0x248] sm:$0xf]
      %v1752 = vld [vmem:[%s165 + $0x250] sm:$0xf]
      %v1753 = vld [vmem:[%s165 + $0x258] sm:$0xf]
      %v1754 = vld [vmem:[%s165 + $0x260] sm:$0xf]
      %v1755 = vld [vmem:[%s165 + $0x268] sm:$0xf]
      %v1756 = vld [vmem:[%s165 + $0x270] sm:$0xf]
      %v1757 = vld [vmem:[%s165 + $0x278] sm:$0xf]
      %v1758 = vld [vmem:[#allocation2] sm:$0xff]
      %v1759 = vld [vmem:[#allocation2 + $0x8] sm:$0xff]
      %v1760 = vld [vmem:[#allocation2 + $0x10] sm:$0xff]
      %v1761 = vld [vmem:[#allocation2 + $0x18] sm:$0xff]
      %v1762 = vld [vmem:[#allocation2 + $0x20] sm:$0xff]
      %v1763 = vld [vmem:[#allocation2 + $0x28] sm:$0xff]
      %v1764 = vld [vmem:[#allocation2 + $0x30] sm:$0xff]
      %v1765 = vld [vmem:[#allocation2 + $0x38] sm:$0xff]
      %v1766 = vld [vmem:[#allocation2 + $0x40] sm:$0xff]
      %v1767 = vld [vmem:[#allocation2 + $0x48] sm:$0xff]
      %v1768 = vld [vmem:[#allocation2 + $0x50] sm:$0xff]
      %v1769 = vld [vmem:[#allocation2 + $0x58] sm:$0xff]
      %v1770 = vld [vmem:[#allocation2 + $0x60] sm:$0xff]
      %v1771 = vld [vmem:[#allocation2 + $0x68] sm:$0xff]
      %v1773 = vsel %vm200, %v1687, 0
      %v1776 = vsel %vm204, %v1744, 0
      %v1779 = vsel %vm204, %v1745, 0
      %v1782 = vsel %vm204, %v1746, 0
      %v1785 = vsel %vm204, %v1747, 0
      %v1788 = vsel %vm204, %v1748, 0
      %v1791 = vsel %vm204, %v1749, 0
      %v1794 = vsel %vm204, %v1750, 0
      %v1797 = vsel %vm204, %v1751, 0
      %v1800 = vsel %vm204, %v1752, 0
      %v1803 = vsel %vm204, %v1753, 0
      %v1806 = vsel %vm204, %v1754, 0
      %v1809 = vsel %vm204, %v1755, 0
      %v1812 = vsel %vm204, %v1756, 0
      %v1815 = vsel %vm204, %v1757, 0
      %1817 = vmatprep.subr.mxu0 0.0
      %1818 = vmatpush1.msra.mxu0 0.0
      %1819 = vmatprep.subr.mxu0 0.0
      %1820 = vmatpush1.msra.mxu0 0.0
      %1821 = vmatprep.subr.mxu0 0.0
      %1822 = vmatpush1.msra.mxu0 0.0
      %1823 = vmatprep.subr.mxu0 0.0
      %1824 = vmatpush1.msra.mxu0 0.0
      %1825 = vmatprep.subr.mxu0 0.0
      %1826 = vmatpush1.msra.mxu0 0.0
      %1827 = vmatprep.subr.mxu0 0.0
      %1828 = vmatpush1.msra.mxu0 0.0
      %1829 = vmatprep.subr.mxu0 0.0
      %1830 = vmatpush1.msra.mxu0 0.0
      %1831 = vmatprep.subr.mxu0 0.0
      %1832 = vmatpush1.msra.mxu0 0.0
      %1833 = vmatprep.subr.mxu0 0.0
      %1834 = vmatpush1.msra.mxu0 0.0
      %1835 = vmatprep.subr.mxu0 0.0
      %1836 = vmatpush1.msra.mxu0 0.0
      %1837 = vmatprep.subr.mxu0 0.0
      %1838 = vmatpush1.msra.mxu0 0.0
      %1839 = vmatprep.subr.mxu0 %v1779
      %1840 = vmatpush1.msra.mxu0 %v1776
      %1841 = vmatprep.subr.mxu0 %v1731
      %1842 = vmatpush1.msra.mxu0 %v1730
      %1843 = vmatprep.subr.mxu0 %v1717
      %1844 = vmatpush1.msra.mxu0 %v1716
      %1845 = vmatprep.subr.mxu0 %v1703
      %1846 = vmatpush1.msra.mxu0 %v1702
      %1847 = vmatprep.subr.mxu0 %v1689
      %1848 = vmatpush1.msra.mxu0 %v1688
      %1849 = vmatprep.subr.mxu0 0.0
      %1850 = vmatpush2.msra.mxu0 0.0
      %1851 = vmatprep.subr.mxu0 0.0
      %1852 = vmatpush2.msra.mxu0 0.0
      %1853 = vmatprep.subr.mxu0 0.0
      %1854 = vmatpush2.msra.mxu0 0.0
      %1855 = vmatprep.subr.mxu0 0.0
      %1856 = vmatpush2.msra.mxu0 0.0
      %1857 = vmatprep.subr.mxu0 0.0
      %1858 = vmatpush2.msra.mxu0 0.0
      %1859 = vmatprep.subr.mxu0 0.0
      %1860 = vmatpush2.msra.mxu0 0.0
      %1861 = vmatprep.subr.mxu0 0.0
      %1862 = vmatpush2.msra.mxu0 0.0
      %1863 = vmatprep.subr.mxu0 0.0
      %1864 = vmatpush2.msra.mxu0 0.0
      %1865 = vmatprep.subr.mxu0 0.0
      %1866 = vmatpush2.msra.mxu0 0.0
      %1867 = vmatprep.subr.mxu0 0.0
      %1868 = vmatpush2.msra.mxu0 0.0
      %1869 = vmatprep.subr.mxu0 0.0
      %1870 = vmatpush2.msra.mxu0 0.0
      %1871 = vmatprep.subr.mxu0 0.0
      %1872 = vmatpush2.msra.mxu0 0.0
      %1873 = vmatprep.subr.mxu0 0.0
      %1874 = vmatpush2.msra.mxu0 0.0
      %1875 = vmatprep.subr.mxu0 0.0
      %1876 = vmatpush2.msra.mxu0 0.0
      %1877 = vmatprep.subr.mxu0 0.0
      %1878 = vmatpush2.msra.mxu0 0.0
      %1879 = vmatprep.subr.mxu0 0.0
      %1880 = vmatpush2.msra.mxu0 0.0
      %1881 = vmatprep.mubr.f32.mxu0 0.0
      %1882 = vmatmul.mubr.f32.gmra.mxu0 %v1773
      %v1883 = vpop.f32.mrf.mxu0
      %v1884 = vadd.f32 0.0, %v1883
      %v1885 = vpop.f32.mrf.mxu0
      %v1886 = vadd.f32 0.0, %v1885
      %1887 = vdwg.mxu0
      %1888 = vmatprep.subr.mxu0 0.0
      %1889 = vmatpush1.msra.mxu0 0.0
      %1890 = vmatprep.subr.mxu0 0.0
      %1891 = vmatpush1.msra.mxu0 0.0
      %1892 = vmatprep.subr.mxu0 0.0
      %1893 = vmatpush1.msra.mxu0 0.0
      %1894 = vmatprep.subr.mxu0 0.0
      %1895 = vmatpush1.msra.mxu0 0.0
      %1896 = vmatprep.subr.mxu0 0.0
      %1897 = vmatpush1.msra.mxu0 0.0
      %1898 = vmatprep.subr.mxu0 0.0
      %1899 = vmatpush1.msra.mxu0 0.0
      %1900 = vmatprep.subr.mxu0 0.0
      %1901 = vmatpush1.msra.mxu0 0.0
      %1902 = vmatprep.subr.mxu0 0.0
      %1903 = vmatpush1.msra.mxu0 0.0
      %1904 = vmatprep.subr.mxu0 0.0
      %1905 = vmatpush1.msra.mxu0 0.0
      %1906 = vmatprep.subr.mxu0 0.0
      %1907 = vmatpush1.msra.mxu0 0.0
      %1908 = vmatprep.subr.mxu0 0.0
      %1909 = vmatpush1.msra.mxu0 0.0
      %1910 = vmatprep.subr.mxu0 %v1785
      %1911 = vmatpush1.msra.mxu0 %v1782
      %1912 = vmatprep.subr.mxu0 %v1733
      %1913 = vmatpush1.msra.mxu0 %v1732
      %1914 = vmatprep.subr.mxu0 %v1719
      %1915 = vmatpush1.msra.mxu0 %v1718
      %1916 = vmatprep.subr.mxu0 %v1705
      %1917 = vmatpush1.msra.mxu0 %v1704
      %1918 = vmatprep.subr.mxu0 %v1691
      %1919 = vmatpush1.msra.mxu0 %v1690
      %1920 = vmatprep.subr.mxu0 0.0
      %1921 = vmatpush2.msra.mxu0 0.0
      %1922 = vmatprep.subr.mxu0 0.0
      %1923 = vmatpush2.msra.mxu0 0.0
      %1924 = vmatprep.subr.mxu0 0.0
      %1925 = vmatpush2.msra.mxu0 0.0
      %1926 = vmatprep.subr.mxu0 0.0
      %1927 = vmatpush2.msra.mxu0 0.0
      %1928 = vmatprep.subr.mxu0 0.0
      %1929 = vmatpush2.msra.mxu0 0.0
      %1930 = vmatprep.subr.mxu0 0.0
      %1931 = vmatpush2.msra.mxu0 0.0
      %1932 = vmatprep.subr.mxu0 0.0
      %1933 = vmatpush2.msra.mxu0 0.0
      %1934 = vmatprep.subr.mxu0 0.0
      %1935 = vmatpush2.msra.mxu0 0.0
      %1936 = vmatprep.subr.mxu0 0.0
      %1937 = vmatpush2.msra.mxu0 0.0
      %1938 = vmatprep.subr.mxu0 0.0
      %1939 = vmatpush2.msra.mxu0 0.0
      %1940 = vmatprep.subr.mxu0 0.0
      %1941 = vmatpush2.msra.mxu0 0.0
      %1942 = vmatprep.subr.mxu0 0.0
      %1943 = vmatpush2.msra.mxu0 0.0
      %1944 = vmatprep.subr.mxu0 0.0
      %1945 = vmatpush2.msra.mxu0 0.0
      %1946 = vmatprep.subr.mxu0 0.0
      %1947 = vmatpush2.msra.mxu0 0.0
      %1948 = vmatprep.subr.mxu0 0.0
      %1949 = vmatpush2.msra.mxu0 0.0
      %1950 = vmatprep.subr.mxu0 0.0
      %1951 = vmatpush2.msra.mxu0 0.0
      %1952 = vmatprep.mubr.f32.mxu0 0.0
      %1953 = vmatmul.mubr.f32.gmra.mxu0 %v1773
      %v1954 = vpop.f32.mrf.mxu0
      %v1955 = vadd.f32 0.0, %v1954
      %v1956 = vpop.f32.mrf.mxu0
      %v1957 = vadd.f32 0.0, %v1956
      %1958 = vdwg.mxu0
      %1959 = vmatprep.subr.mxu0 0.0
      %1960 = vmatpush1.msra.mxu0 0.0
      %1961 = vmatprep.subr.mxu0 0.0
      %1962 = vmatpush1.msra.mxu0 0.0
      %1963 = vmatprep.subr.mxu0 0.0
      %1964 = vmatpush1.msra.mxu0 0.0
      %1965 = vmatprep.subr.mxu0 0.0
      %1966 = vmatpush1.msra.mxu0 0.0
      %1967 = vmatprep.subr.mxu0 0.0
      %1968 = vmatpush1.msra.mxu0 0.0
      %1969 = vmatprep.subr.mxu0 0.0
      %1970 = vmatpush1.msra.mxu0 0.0
      %1971 = vmatprep.subr.mxu0 0.0
      %1972 = vmatpush1.msra.mxu0 0.0
      %1973 = vmatprep.subr.mxu0 0.0
      %1974 = vmatpush1.msra.mxu0 0.0
      %1975 = vmatprep.subr.mxu0 0.0
      %1976 = vmatpush1.msra.mxu0 0.0
      %1977 = vmatprep.subr.mxu0 0.0
      %1978 = vmatpush1.msra.mxu0 0.0
      %1979 = vmatprep.subr.mxu0 0.0
      %1980 = vmatpush1.msra.mxu0 0.0
      %1981 = vmatprep.subr.mxu0 %v1791
      %1982 = vmatpush1.msra.mxu0 %v1788
      %1983 = vmatprep.subr.mxu0 %v1735
      %1984 = vmatpush1.msra.mxu0 %v1734
      %1985 = vmatprep.subr.mxu0 %v1721
      %1986 = vmatpush1.msra.mxu0 %v1720
      %1987 = vmatprep.subr.mxu0 %v1707
      %1988 = vmatpush1.msra.mxu0 %v1706
      %1989 = vmatprep.subr.mxu0 %v1693
      %1990 = vmatpush1.msra.mxu0 %v1692
      %1991 = vmatprep.subr.mxu0 0.0
      %1992 = vmatpush2.msra.mxu0 0.0
      %1993 = vmatprep.subr.mxu0 0.0
      %1994 = vmatpush2.msra.mxu0 0.0
      %1995 = vmatprep.subr.mxu0 0.0
      %1996 = vmatpush2.msra.mxu0 0.0
      %1997 = vmatprep.subr.mxu0 0.0
      %1998 = vmatpush2.msra.mxu0 0.0
      %1999 = vmatprep.subr.mxu0 0.0
      %2000 = vmatpush2.msra.mxu0 0.0
      %2001 = vmatprep.subr.mxu0 0.0
      %2002 = vmatpush2.msra.mxu0 0.0
      %2003 = vmatprep.subr.mxu0 0.0
      %2004 = vmatpush2.msra.mxu0 0.0
      %2005 = vmatprep.subr.mxu0 0.0
      %2006 = vmatpush2.msra.mxu0 0.0
      %2007 = vmatprep.subr.mxu0 0.0
      %2008 = vmatpush2.msra.mxu0 0.0
      %2009 = vmatprep.subr.mxu0 0.0
      %2010 = vmatpush2.msra.mxu0 0.0
      %2011 = vmatprep.subr.mxu0 0.0
      %2012 = vmatpush2.msra.mxu0 0.0
      %2013 = vmatprep.subr.mxu0 0.0
      %2014 = vmatpush2.msra.mxu0 0.0
      %2015 = vmatprep.subr.mxu0 0.0
      %2016 = vmatpush2.msra.mxu0 0.0
      %2017 = vmatprep.subr.mxu0 0.0
      %2018 = vmatpush2.msra.mxu0 0.0
      %2019 = vmatprep.subr.mxu0 0.0
      %2020 = vmatpush2.msra.mxu0 0.0
      %2021 = vmatprep.subr.mxu0 0.0
      %2022 = vmatpush2.msra.mxu0 0.0
      %2023 = vmatprep.mubr.f32.mxu0 0.0
      %2024 = vmatmul.mubr.f32.gmra.mxu0 %v1773
      %v2025 = vpop.f32.mrf.mxu0
      %v2026 = vadd.f32 0.0, %v2025
      %v2027 = vpop.f32.mrf.mxu0
      %v2028 = vadd.f32 0.0, %v2027
      %2029 = vdwg.mxu0
      %2030 = vmatprep.subr.mxu0 0.0
      %2031 = vmatpush1.msra.mxu0 0.0
      %2032 = vmatprep.subr.mxu0 0.0
      %2033 = vmatpush1.msra.mxu0 0.0
      %2034 = vmatprep.subr.mxu0 0.0
      %2035 = vmatpush1.msra.mxu0 0.0
      %2036 = vmatprep.subr.mxu0 0.0
      %2037 = vmatpush1.msra.mxu0 0.0
      %2038 = vmatprep.subr.mxu0 0.0
      %2039 = vmatpush1.msra.mxu0 0.0
      %2040 = vmatprep.subr.mxu0 0.0
      %2041 = vmatpush1.msra.mxu0 0.0
      %2042 = vmatprep.subr.mxu0 0.0
      %2043 = vmatpush1.msra.mxu0 0.0
      %2044 = vmatprep.subr.mxu0 0.0
      %2045 = vmatpush1.msra.mxu0 0.0
      %2046 = vmatprep.subr.mxu0 0.0
      %2047 = vmatpush1.msra.mxu0 0.0
      %2048 = vmatprep.subr.mxu0 0.0
      %2049 = vmatpush1.msra.mxu0 0.0
      %2050 = vmatprep.subr.mxu0 0.0
      %2051 = vmatpush1.msra.mxu0 0.0
      %2052 = vmatprep.subr.mxu0 %v1797
      %2053 = vmatpush1.msra.mxu0 %v1794
      %2054 = vmatprep.subr.mxu0 %v1737
      %2055 = vmatpush1.msra.mxu0 %v1736
      %2056 = vmatprep.subr.mxu0 %v1723
      %2057 = vmatpush1.msra.mxu0 %v1722
      %2058 = vmatprep.subr.mxu0 %v1709
      %2059 = vmatpush1.msra.mxu0 %v1708
      %2060 = vmatprep.subr.mxu0 %v1695
      %2061 = vmatpush1.msra.mxu0 %v1694
      %2062 = vmatprep.subr.mxu0 0.0
      %2063 = vmatpush2.msra.mxu0 0.0
      %2064 = vmatprep.subr.mxu0 0.0
      %2065 = vmatpush2.msra.mxu0 0.0
      %2066 = vmatprep.subr.mxu0 0.0
      %2067 = vmatpush2.msra.mxu0 0.0
      %2068 = vmatprep.subr.mxu0 0.0
      %2069 = vmatpush2.msra.mxu0 0.0
      %2070 = vmatprep.subr.mxu0 0.0
      %2071 = vmatpush2.msra.mxu0 0.0
      %2072 = vmatprep.subr.mxu0 0.0
      %2073 = vmatpush2.msra.mxu0 0.0
      %2074 = vmatprep.subr.mxu0 0.0
      %2075 = vmatpush2.msra.mxu0 0.0
      %2076 = vmatprep.subr.mxu0 0.0
      %2077 = vmatpush2.msra.mxu0 0.0
      %2078 = vmatprep.subr.mxu0 0.0
      %2079 = vmatpush2.msra.mxu0 0.0
      %2080 = vmatprep.subr.mxu0 0.0
      %2081 = vmatpush2.msra.mxu0 0.0
      %2082 = vmatprep.subr.mxu0 0.0
      %2083 = vmatpush2.msra.mxu0 0.0
      %2084 = vmatprep.subr.mxu0 0.0
      %2085 = vmatpush2.msra.mxu0 0.0
      %2086 = vmatprep.subr.mxu0 0.0
      %2087 = vmatpush2.msra.mxu0 0.0
      %2088 = vmatprep.subr.mxu0 0.0
      %2089 = vmatpush2.msra.mxu0 0.0
      %2090 = vmatprep.subr.mxu0 0.0
      %2091 = vmatpush2.msra.mxu0 0.0
      %2092 = vmatprep.subr.mxu0 0.0
      %2093 = vmatpush2.msra.mxu0 0.0
      %2094 = vmatprep.mubr.f32.mxu0 0.0
      %2095 = vmatmul.mubr.f32.gmra.mxu0 %v1773
      %v2096 = vpop.f32.mrf.mxu0
      %v2097 = vadd.f32 0.0, %v2096
      %v2098 = vpop.f32.mrf.mxu0
      %v2099 = vadd.f32 0.0, %v2098
      %2100 = vdwg.mxu0
      %2101 = vmatprep.subr.mxu0 0.0
      %2102 = vmatpush1.msra.mxu0 0.0
      %2103 = vmatprep.subr.mxu0 0.0
      %2104 = vmatpush1.msra.mxu0 0.0
      %2105 = vmatprep.subr.mxu0 0.0
      %2106 = vmatpush1.msra.mxu0 0.0
      %2107 = vmatprep.subr.mxu0 0.0
      %2108 = vmatpush1.msra.mxu0 0.0
      %2109 = vmatprep.subr.mxu0 0.0
      %2110 = vmatpush1.msra.mxu0 0.0
      %2111 = vmatprep.subr.mxu0 0.0
      %2112 = vmatpush1.msra.mxu0 0.0
      %2113 = vmatprep.subr.mxu0 0.0
      %2114 = vmatpush1.msra.mxu0 0.0
      %2115 = vmatprep.subr.mxu0 0.0
      %2116 = vmatpush1.msra.mxu0 0.0
      %2117 = vmatprep.subr.mxu0 0.0
      %2118 = vmatpush1.msra.mxu0 0.0
      %2119 = vmatprep.subr.mxu0 0.0
      %2120 = vmatpush1.msra.mxu0 0.0
      %2121 = vmatprep.subr.mxu0 0.0
      %2122 = vmatpush1.msra.mxu0 0.0
      %2123 = vmatprep.subr.mxu0 %v1803
      %2124 = vmatpush1.msra.mxu0 %v1800
      %2125 = vmatprep.subr.mxu0 %v1739
      %2126 = vmatpush1.msra.mxu0 %v1738
      %2127 = vmatprep.subr.mxu0 %v1725
      %2128 = vmatpush1.msra.mxu0 %v1724
      %2129 = vmatprep.subr.mxu0 %v1711
      %2130 = vmatpush1.msra.mxu0 %v1710
      %2131 = vmatprep.subr.mxu0 %v1697
      %2132 = vmatpush1.msra.mxu0 %v1696
      %2133 = vmatprep.subr.mxu0 0.0
      %2134 = vmatpush2.msra.mxu0 0.0
      %2135 = vmatprep.subr.mxu0 0.0
      %2136 = vmatpush2.msra.mxu0 0.0
      %2137 = vmatprep.subr.mxu0 0.0
      %2138 = vmatpush2.msra.mxu0 0.0
      %2139 = vmatprep.subr.mxu0 0.0
      %2140 = vmatpush2.msra.mxu0 0.0
      %2141 = vmatprep.subr.mxu0 0.0
      %2142 = vmatpush2.msra.mxu0 0.0
      %2143 = vmatprep.subr.mxu0 0.0
      %2144 = vmatpush2.msra.mxu0 0.0
      %2145 = vmatprep.subr.mxu0 0.0
      %2146 = vmatpush2.msra.mxu0 0.0
      %2147 = vmatprep.subr.mxu0 0.0
      %2148 = vmatpush2.msra.mxu0 0.0
      %2149 = vmatprep.subr.mxu0 0.0
      %2150 = vmatpush2.msra.mxu0 0.0
      %2151 = vmatprep.subr.mxu0 0.0
      %2152 = vmatpush2.msra.mxu0 0.0
      %2153 = vmatprep.subr.mxu0 0.0
      %2154 = vmatpush2.msra.mxu0 0.0
      %2155 = vmatprep.subr.mxu0 0.0
      %2156 = vmatpush2.msra.mxu0 0.0
      %2157 = vmatprep.subr.mxu0 0.0
      %2158 = vmatpush2.msra.mxu0 0.0
      %2159 = vmatprep.subr.mxu0 0.0
      %2160 = vmatpush2.msra.mxu0 0.0
      %2161 = vmatprep.subr.mxu0 0.0
      %2162 = vmatpush2.msra.mxu0 0.0
      %2163 = vmatprep.subr.mxu0 0.0
      %2164 = vmatpush2.msra.mxu0 0.0
      %2165 = vmatprep.mubr.f32.mxu0 0.0
      %2166 = vmatmul.mubr.f32.gmra.mxu0 %v1773
      %v2167 = vpop.f32.mrf.mxu0
      %v2168 = vadd.f32 0.0, %v2167
      %v2169 = vpop.f32.mrf.mxu0
      %v2170 = vadd.f32 0.0, %v2169
      %2171 = vdwg.mxu0
      %2172 = vmatprep.subr.mxu0 0.0
      %2173 = vmatpush1.msra.mxu0 0.0
      %2174 = vmatprep.subr.mxu0 0.0
      %2175 = vmatpush1.msra.mxu0 0.0
      %2176 = vmatprep.subr.mxu0 0.0
      %2177 = vmatpush1.msra.mxu0 0.0
      %2178 = vmatprep.subr.mxu0 0.0
      %2179 = vmatpush1.msra.mxu0 0.0
      %2180 = vmatprep.subr.mxu0 0.0
      %2181 = vmatpush1.msra.mxu0 0.0
      %2182 = vmatprep.subr.mxu0 0.0
      %2183 = vmatpush1.msra.mxu0 0.0
      %2184 = vmatprep.subr.mxu0 0.0
      %2185 = vmatpush1.msra.mxu0 0.0
      %2186 = vmatprep.subr.mxu0 0.0
      %2187 = vmatpush1.msra.mxu0 0.0
      %2188 = vmatprep.subr.mxu0 0.0
      %2189 = vmatpush1.msra.mxu0 0.0
      %2190 = vmatprep.subr.mxu0 0.0
      %2191 = vmatpush1.msra.mxu0 0.0
      %2192 = vmatprep.subr.mxu0 0.0
      %2193 = vmatpush1.msra.mxu0 0.0
      %2194 = vmatprep.subr.mxu0 %v1809
      %2195 = vmatpush1.msra.mxu0 %v1806
      %2196 = vmatprep.subr.mxu0 %v1741
      %2197 = vmatpush1.msra.mxu0 %v1740
      %2198 = vmatprep.subr.mxu0 %v1727
      %2199 = vmatpush1.msra.mxu0 %v1726
      %2200 = vmatprep.subr.mxu0 %v1713
      %2201 = vmatpush1.msra.mxu0 %v1712
      %2202 = vmatprep.subr.mxu0 %v1699
      %2203 = vmatpush1.msra.mxu0 %v1698
      %2204 = vmatprep.subr.mxu0 0.0
      %2205 = vmatpush2.msra.mxu0 0.0
      %2206 = vmatprep.subr.mxu0 0.0
      %2207 = vmatpush2.msra.mxu0 0.0
      %2208 = vmatprep.subr.mxu0 0.0
      %2209 = vmatpush2.msra.mxu0 0.0
      %2210 = vmatprep.subr.mxu0 0.0
      %2211 = vmatpush2.msra.mxu0 0.0
      %2212 = vmatprep.subr.mxu0 0.0
      %2213 = vmatpush2.msra.mxu0 0.0
      %2214 = vmatprep.subr.mxu0 0.0
      %2215 = vmatpush2.msra.mxu0 0.0
      %2216 = vmatprep.subr.mxu0 0.0
      %2217 = vmatpush2.msra.mxu0 0.0
      %2218 = vmatprep.subr.mxu0 0.0
      %2219 = vmatpush2.msra.mxu0 0.0
      %2220 = vmatprep.subr.mxu0 0.0
      %2221 = vmatpush2.msra.mxu0 0.0
      %2222 = vmatprep.subr.mxu0 0.0
      %2223 = vmatpush2.msra.mxu0 0.0
      %2224 = vmatprep.subr.mxu0 0.0
      %2225 = vmatpush2.msra.mxu0 0.0
      %2226 = vmatprep.subr.mxu0 0.0
      %2227 = vmatpush2.msra.mxu0 0.0
      %2228 = vmatprep.subr.mxu0 0.0
      %2229 = vmatpush2.msra.mxu0 0.0
      %2230 = vmatprep.subr.mxu0 0.0
      %2231 = vmatpush2.msra.mxu0 0.0
      %2232 = vmatprep.subr.mxu0 0.0
      %2233 = vmatpush2.msra.mxu0 0.0
      %2234 = vmatprep.subr.mxu0 0.0
      %2235 = vmatpush2.msra.mxu0 0.0
      %2236 = vmatprep.mubr.f32.mxu0 0.0
      %2237 = vmatmul.mubr.f32.gmra.mxu0 %v1773
      %v2238 = vpop.f32.mrf.mxu0
      %v2239 = vadd.f32 0.0, %v2238
      %v2240 = vpop.f32.mrf.mxu0
      %v2241 = vadd.f32 0.0, %v2240
      %2242 = vdwg.mxu0
      %2243 = vmatprep.subr.mxu0 0.0
      %2244 = vmatpush1.msra.mxu0 0.0
      %2245 = vmatprep.subr.mxu0 0.0
      %2246 = vmatpush1.msra.mxu0 0.0
      %2247 = vmatprep.subr.mxu0 0.0
      %2248 = vmatpush1.msra.mxu0 0.0
      %2249 = vmatprep.subr.mxu0 0.0
      %2250 = vmatpush1.msra.mxu0 0.0
      %2251 = vmatprep.subr.mxu0 0.0
      %2252 = vmatpush1.msra.mxu0 0.0
      %2253 = vmatprep.subr.mxu0 0.0
      %2254 = vmatpush1.msra.mxu0 0.0
      %2255 = vmatprep.subr.mxu0 0.0
      %2256 = vmatpush1.msra.mxu0 0.0
      %2257 = vmatprep.subr.mxu0 0.0
      %2258 = vmatpush1.msra.mxu0 0.0
      %2259 = vmatprep.subr.mxu0 0.0
      %2260 = vmatpush1.msra.mxu0 0.0
      %2261 = vmatprep.subr.mxu0 0.0
      %2262 = vmatpush1.msra.mxu0 0.0
      %2263 = vmatprep.subr.mxu0 0.0
      %2264 = vmatpush1.msra.mxu0 0.0
      %2265 = vmatprep.subr.mxu0 %v1815
      %2266 = vmatpush1.msra.mxu0 %v1812
      %2267 = vmatprep.subr.mxu0 %v1743
      %2268 = vmatpush1.msra.mxu0 %v1742
      %2269 = vmatprep.subr.mxu0 %v1729
      %2270 = vmatpush1.msra.mxu0 %v1728
      %2271 = vmatprep.subr.mxu0 %v1715
      %2272 = vmatpush1.msra.mxu0 %v1714
      %2273 = vmatprep.subr.mxu0 %v1701
      %2274 = vmatpush1.msra.mxu0 %v1700
      %2275 = vmatprep.subr.mxu0 0.0
      %2276 = vmatpush2.msra.mxu0 0.0
      %2277 = vmatprep.subr.mxu0 0.0
      %2278 = vmatpush2.msra.mxu0 0.0
      %2279 = vmatprep.subr.mxu0 0.0
      %2280 = vmatpush2.msra.mxu0 0.0
      %2281 = vmatprep.subr.mxu0 0.0
      %2282 = vmatpush2.msra.mxu0 0.0
      %2283 = vmatprep.subr.mxu0 0.0
      %2284 = vmatpush2.msra.mxu0 0.0
      %2285 = vmatprep.subr.mxu0 0.0
      %2286 = vmatpush2.msra.mxu0 0.0
      %2287 = vmatprep.subr.mxu0 0.0
      %2288 = vmatpush2.msra.mxu0 0.0
      %2289 = vmatprep.subr.mxu0 0.0
      %2290 = vmatpush2.msra.mxu0 0.0
      %2291 = vmatprep.subr.mxu0 0.0
      %2292 = vmatpush2.msra.mxu0 0.0
      %2293 = vmatprep.subr.mxu0 0.0
      %2294 = vmatpush2.msra.mxu0 0.0
      %2295 = vmatprep.subr.mxu0 0.0
      %2296 = vmatpush2.msra.mxu0 0.0
      %2297 = vmatprep.subr.mxu0 0.0
      %2298 = vmatpush2.msra.mxu0 0.0
      %2299 = vmatprep.subr.mxu0 0.0
      %2300 = vmatpush2.msra.mxu0 0.0
      %2301 = vmatprep.subr.mxu0 0.0
      %2302 = vmatpush2.msra.mxu0 0.0
      %2303 = vmatprep.subr.mxu0 0.0
      %2304 = vmatpush2.msra.mxu0 0.0
      %2305 = vmatprep.subr.mxu0 0.0
      %2306 = vmatpush2.msra.mxu0 0.0
      %2307 = vmatprep.mubr.f32.mxu0 0.0
      %2308 = vmatmul.mubr.f32.gmra.mxu0 %v1773
      %v2309 = vpop.f32.mrf.mxu0
      %v2310 = vadd.f32 0.0, %v2309
      %v2311 = vpop.f32.mrf.mxu0
      %v2312 = vadd.f32 0.0, %v2311
      %2313 = vdwg.mxu0
      %v2314 = vadd.f32 %v1758, %v1884
      %v2315 = vadd.f32 %v1759, %v1886
      %v2316 = vadd.f32 %v1760, %v1955
      %v2317 = vadd.f32 %v1761, %v1957
      %v2318 = vadd.f32 %v1762, %v2026
      %v2319 = vadd.f32 %v1763, %v2028
      %v2320 = vadd.f32 %v1764, %v2097
      %v2321 = vadd.f32 %v1765, %v2099
      %v2322 = vadd.f32 %v1766, %v2168
      %v2323 = vadd.f32 %v1767, %v2170
      %v2324 = vadd.f32 %v1768, %v2239
      %v2325 = vadd.f32 %v1769, %v2241
      %v2326 = vadd.f32 %v1770, %v2310
      %v2327 = vadd.f32 %v1771, %v2312
      %2328 = vst [vmem:[#allocation2] sm:$0xff] %v2314
      %2329 = vst [vmem:[#allocation2 + $0x8] sm:$0xff] %v2315
      %2330 = vst [vmem:[#allocation2 + $0x10] sm:$0xff] %v2316
      %2331 = vst [vmem:[#allocation2 + $0x18] sm:$0xff] %v2317
      %2332 = vst [vmem:[#allocation2 + $0x20] sm:$0xff] %v2318
      %2333 = vst [vmem:[#allocation2 + $0x28] sm:$0xff] %v2319
      %2334 = vst [vmem:[#allocation2 + $0x30] sm:$0xff] %v2320
      %2335 = vst [vmem:[#allocation2 + $0x38] sm:$0xff] %v2321
      %2336 = vst [vmem:[#allocation2 + $0x40] sm:$0xff] %v2322
      %2337 = vst [vmem:[#allocation2 + $0x48] sm:$0xff] %v2323
      %2338 = vst [vmem:[#allocation2 + $0x50] sm:$0xff] %v2324
      %2339 = vst [vmem:[#allocation2 + $0x58] sm:$0xff] %v2325
      %2340 = vst [vmem:[#allocation2 + $0x60] sm:$0xff] %v2326
      %2341 = vst [vmem:[#allocation2 + $0x68] sm:$0xff] %v2327
      %v2342 = vld [vmem:[%s165 + $0x70] sm:$0xff]
      %v2343 = vld [vmem:[%s165 + $0x78] sm:$0xff]
      %v2344 = vld [vmem:[%s165 + $0xf0] sm:$0xff]
      %v2345 = vld [vmem:[%s165 + $0xf8] sm:$0xff]
      %v2346 = vld [vmem:[%s165 + $0x170] sm:$0xff]
      %v2347 = vld [vmem:[%s165 + $0x178] sm:$0xff]
      %v2348 = vld [vmem:[%s165 + $0x1f0] sm:$0xff]
      %v2349 = vld [vmem:[%s165 + $0x1f8] sm:$0xff]
      %v2350 = vld [vmem:[%s165 + $0x270] sm:$0xf]
      %v2351 = vld [vmem:[%s165 + $0x278] sm:$0xf]
      %v2352 = vld [vmem:[#allocation2 + $0x70] sm:$0xff]
      %v2353 = vld [vmem:[#allocation2 + $0x78] sm:$0xff]
      %v2355 = vsel %vm204, %v2350, 0
      %v2358 = vsel %vm204, %v2351, 0
      %2360 = vmatprep.subr.mxu0 0.0
      %2361 = vmatpush1.msra.mxu0 0.0
      %2362 = vmatprep.subr.mxu0 0.0
      %2363 = vmatpush1.msra.mxu0 0.0
      %2364 = vmatprep.subr.mxu0 0.0
      %2365 = vmatpush1.msra.mxu0 0.0
      %2366 = vmatprep.subr.mxu0 0.0
      %2367 = vmatpush1.msra.mxu0 0.0
      %2368 = vmatprep.subr.mxu0 0.0
      %2369 = vmatpush1.msra.mxu0 0.0
      %2370 = vmatprep.subr.mxu0 0.0
      %2371 = vmatpush1.msra.mxu0 0.0
      %2372 = vmatprep.subr.mxu0 0.0
      %2373 = vmatpush1.msra.mxu0 0.0
      %2374 = vmatprep.subr.mxu0 0.0
      %2375 = vmatpush1.msra.mxu0 0.0
      %2376 = vmatprep.subr.mxu0 0.0
      %2377 = vmatpush1.msra.mxu0 0.0
      %2378 = vmatprep.subr.mxu0 0.0
      %2379 = vmatpush1.msra.mxu0 0.0
      %2380 = vmatprep.subr.mxu0 0.0
      %2381 = vmatpush1.msra.mxu0 0.0
      %2382 = vmatprep.subr.mxu0 %v2358
      %2383 = vmatpush1.msra.mxu0 %v2355
      %2384 = vmatprep.subr.mxu0 %v2349
      %2385 = vmatpush1.msra.mxu0 %v2348
      %2386 = vmatprep.subr.mxu0 %v2347
      %2387 = vmatpush1.msra.mxu0 %v2346
      %2388 = vmatprep.subr.mxu0 %v2345
      %2389 = vmatpush1.msra.mxu0 %v2344
      %2390 = vmatprep.subr.mxu0 %v2343
      %2391 = vmatpush1.msra.mxu0 %v2342
      %2392 = vmatprep.subr.mxu0 0.0
      %2393 = vmatpush2.msra.mxu0 0.0
      %2394 = vmatprep.subr.mxu0 0.0
      %2395 = vmatpush2.msra.mxu0 0.0
      %2396 = vmatprep.subr.mxu0 0.0
      %2397 = vmatpush2.msra.mxu0 0.0
      %2398 = vmatprep.subr.mxu0 0.0
      %2399 = vmatpush2.msra.mxu0 0.0
      %2400 = vmatprep.subr.mxu0 0.0
      %2401 = vmatpush2.msra.mxu0 0.0
      %2402 = vmatprep.subr.mxu0 0.0
      %2403 = vmatpush2.msra.mxu0 0.0
      %2404 = vmatprep.subr.mxu0 0.0
      %2405 = vmatpush2.msra.mxu0 0.0
      %2406 = vmatprep.subr.mxu0 0.0
      %2407 = vmatpush2.msra.mxu0 0.0
      %2408 = vmatprep.subr.mxu0 0.0
      %2409 = vmatpush2.msra.mxu0 0.0
      %2410 = vmatprep.subr.mxu0 0.0
      %2411 = vmatpush2.msra.mxu0 0.0
      %2412 = vmatprep.subr.mxu0 0.0
      %2413 = vmatpush2.msra.mxu0 0.0
      %2414 = vmatprep.subr.mxu0 0.0
      %2415 = vmatpush2.msra.mxu0 0.0
      %2416 = vmatprep.subr.mxu0 0.0
      %2417 = vmatpush2.msra.mxu0 0.0
      %2418 = vmatprep.subr.mxu0 0.0
      %2419 = vmatpush2.msra.mxu0 0.0
      %2420 = vmatprep.subr.mxu0 0.0
      %2421 = vmatpush2.msra.mxu0 0.0
      %2422 = vmatprep.subr.mxu0 0.0
      %2423 = vmatpush2.msra.mxu0 0.0
      %2424 = vmatprep.mubr.f32.mxu0 0.0
      %2425 = vmatmul.mubr.f32.gmra.mxu0 %v1773
      %v2426 = vpop.f32.mrf.mxu0
      %v2427 = vadd.f32 0.0, %v2426
      %v2428 = vpop.f32.mrf.mxu0
      %v2429 = vadd.f32 0.0, %v2428
      %2430 = vdwg.mxu0
      %v2431 = vadd.f32 %v2352, %v2427
      %v2432 = vadd.f32 %v2353, %v2429
      %2433 = vst [vmem:[#allocation2 + $0x70] sm:$0xff] %v2431
      %2434 = vst [vmem:[#allocation2 + $0x78] sm:$0xff] %v2432
      %v2435 = vld [vmem:[#allocation2] sm:$0xff]
      %v2436 = vld [vmem:[#allocation2 + $0x8] sm:$0xff]
      %v2437 = vld [vmem:[#allocation2 + $0x10] sm:$0xff]
      %v2438 = vld [vmem:[#allocation2 + $0x18] sm:$0xff]
      %v2439 = vld [vmem:[#allocation2 + $0x20] sm:$0xff]
      %v2440 = vld [vmem:[#allocation2 + $0x28] sm:$0xff]
      %v2441 = vld [vmem:[#allocation2 + $0x30] sm:$0xff]
      %v2442 = vld [vmem:[#allocation2 + $0x38] sm:$0xff]
      %v2443 = vld [vmem:[#allocation2 + $0x40] sm:$0xff]
      %v2444 = vld [vmem:[#allocation2 + $0x48] sm:$0xff]
      %v2445 = vld [vmem:[#allocation2 + $0x50] sm:$0xff]
      %v2446 = vld [vmem:[#allocation2 + $0x58] sm:$0xff]
      %v2447 = vld [vmem:[#allocation2 + $0x60] sm:$0xff]
      %v2448 = vld [vmem:[#allocation2 + $0x68] sm:$0xff]
      %v2449 = vld [vmem:[#allocation2 + $0x70] sm:$0xff]
      %v2450 = vld [vmem:[#allocation2 + $0x78] sm:$0xff]
      %v2451 = vld [vmem:[%s2] sm:$0xff]
      %2453 = vset.pattern.permute.xlu0 0
      %2454 = vperm.xlu0 %2453, %v2451
      %v2455 = vpop.permute.xlu0 %2454
      %v2457 = vadd.f32 %v2435, %v2455
      %v2458 = vadd.f32 %v2436, %v2455
      %v2459 = vadd.f32 %v2437, %v2455
      %v2460 = vadd.f32 %v2438, %v2455
      %v2461 = vadd.f32 %v2439, %v2455
      %v2462 = vadd.f32 %v2440, %v2455
      %v2463 = vadd.f32 %v2441, %v2455
      %v2464 = vadd.f32 %v2442, %v2455
      %v2465 = vadd.f32 %v2443, %v2455
      %v2466 = vadd.f32 %v2444, %v2455
      %v2467 = vadd.f32 %v2445, %v2455
      %v2468 = vadd.f32 %v2446, %v2455
      %v2469 = vadd.f32 %v2447, %v2455
      %v2470 = vadd.f32 %v2448, %v2455
      %v2471 = vadd.f32 %v2449, %v2455
      %v2472 = vadd.f32 %v2450, %v2455
      %2473 = vst [vmem:[%s170] sm:$0xff] %v2457
      %2474 = vst [vmem:[%s170 + $0x8] sm:$0xff] %v2458
      %2475 = vst [vmem:[%s170 + $0x10] sm:$0xff] %v2459
      %2476 = vst [vmem:[%s170 + $0x18] sm:$0xff] %v2460
      %2477 = vst [vmem:[%s170 + $0x20] sm:$0xff] %v2461
      %2478 = vst [vmem:[%s170 + $0x28] sm:$0xff] %v2462
      %2479 = vst [vmem:[%s170 + $0x30] sm:$0xff] %v2463
      %2480 = vst [vmem:[%s170 + $0x38] sm:$0xff] %v2464
      %2481 = vst [vmem:[%s170 + $0x40] sm:$0xff] %v2465
      %2482 = vst [vmem:[%s170 + $0x48] sm:$0xff] %v2466
      %2483 = vst [vmem:[%s170 + $0x50] sm:$0xff] %v2467
      %2484 = vst [vmem:[%s170 + $0x58] sm:$0xff] %v2468
      %2485 = vst [vmem:[%s170 + $0x60] sm:$0xff] %v2469
      %2486 = vst [vmem:[%s170 + $0x68] sm:$0xff] %v2470
      %2487 = vst [vmem:[%s170 + $0x70] sm:$0xff] %v2471
      %2488 = vst [vmem:[%s170 + $0x78] sm:$0xff] %v2472
      %p2489 = scmp.lt.s32.totalorder %s14, 1
      %s2490 = scalar_select %p2489, %s14, 1
      %s2491 = smul.addr %s2490, 16
      %s2492 = smul.addr %s2491, 8
      %s2493 = scalar_lea.vmem %s3, %s2492
      // Predicated region
      $region33: #{conv2plus1d_pallas.1} parent=31 // pred_check
        %p2494 = pneg %p100
      $region34: #{conv2plus1d_pallas.1} parent=31 // pred_check_branch
        %2496 = sbr.rel (%p2494) target = $region36
      $region35: #{conv2plus1d_pallas.1} parent=31 // pred_region
        _
      $region36: #{conv2plus1d_pallas.1} parent=31 // pred_fallthru
        _
    $region32: #{conv2plus1d_pallas.1} parent=5 // pred_fallthru
      _
    %p2497 = scmp.le.s32.totalorder 2, %s9
    // Predicated region
    $region37: #{conv2plus1d_pallas.1} parent=5 // pred_check
      %p2498 = pneg %p2497
    $region38: #{conv2plus1d_pallas.1} parent=5 // pred_check_branch
      %2500 = sbr.rel (%p2498) target = $region40
    $region39: #{conv2plus1d_pallas.1} parent=5 // pred_region
      %s2501 = ssub.s32 %s9, 2
      // Predicated region
      $region41: #{conv2plus1d_pallas.1} parent=39 // pred_check
        %p2502 = pneg %p106
      $region42: #{conv2plus1d_pallas.1} parent=39 // pred_check_branch
        %2504 = sbr.rel (%p2502) target = $region44
      $region43: #{conv2plus1d_pallas.1} parent=39 // pred_region
        %p2505 = scmp.lt.s32.totalorder %s15, 1
        %s2506 = scalar_select %p2505, %s15, 1
        %s2507 = smul.addr %s2506, 16
        %s2508 = smul.addr %s2507, 8
        %s2509 = scalar_lea.vmem %s3, %s2508
      $region44: #{conv2plus1d_pallas.1} parent=39 // pred_fallthru
        _
    $region40: #{conv2plus1d_pallas.1} parent=5 // pred_fallthru
      _
  $region6: #{conv2plus1d_pallas.1} parent=0 // loop_footer
    %s13 = sadd.s32 1, %s9
  $region7: #{conv2plus1d_pallas.1} parent=0 // loop_footer_branch
    %8 = sbr.rel target = $region3
  $region8: #{conv2plus1d_pallas.1} parent=0 // loop_exit
    _

</llo_original>
